<compile_context>
chip_gen: v6e
topology: v6e:2x2x1
jax: 0.10.0
libtpu: 0.0.40
codegen_flags: <defaults>
</compile_context>

<pallas_src>
import functools
import math

import jax
import jax.numpy as jnp
from jax import lax
from jax.experimental import pallas as pl
from jax.experimental.pallas import tpu as pltpu

LANE = 128      # the packed 3-gate block and the vocab dim are padded to 128 lanes
SUBLANE = 8     # f32 sublane multiple for the (padded) batch dimension


def _round_up(x, m):
    return (x + m - 1) // m * m


# ----------------------------- Pallas kernel --------------------------------

def gru_stack_kernel(*refs, seq_len, batch_p, hid, num_layers, project, unroll):
    """Fused multi-layer GRU over the whole sequence in ONE kernel invocation.

    Ref order (project=True, decoder):
      x, w_ih0, b_ih0, w_ih_rest, b_ih_rest, w_hh, b_hh, h0, dense_w, dense_b |
      logits_out, state_out | act_scratch, gi_scratch
    Ref order (project=False, encoder):
      x, w_ih0, b_ih0, w_ih_rest, b_ih_rest, w_hh, b_hh, h0 |
      out (doubles as inter-layer act buffer), state_out | gi_scratch

    Gate layout: the 3 gates [r|z|n] occupy lanes [0, 3*H) of a single
    lane-tile of width Gp = round_up(3*H, 128).
    """
    if project:
        (x_ref, w_ih0_ref, b_ih0_ref, w_ih_ref, b_ih_ref, w_hh_ref, b_hh_ref,
         h0_ref, dense_w_ref, dense_b_ref,
         logits_ref, state_ref, act_ref, gi_ref) = refs
    else:
        (x_ref, w_ih0_ref, b_ih0_ref, w_ih_ref, b_ih_ref, w_hh_ref, b_hh_ref,
         h0_ref, act_ref, state_ref, gi_ref) = refs

    T, Bp, H, L = seq_len, batch_p, hid, num_layers
    Gp = w_hh_ref.shape[-1]

    for l in range(L):
        # ---- hoisted, non-recurrent batched input projection (one MXU call) --
        # Every layer writes the SAME gi scratch buffer (no duplicate gi0).
        if l == 0:
            src = x_ref[...]
            w_ih_l = w_ih0_ref[...]
            b_ih_l = b_ih0_ref[...]
        else:
            src = act_ref[...]
            w_ih_l = w_ih_ref[l - 1]
            b_ih_l = b_ih_ref[l - 1]
        gi_ref[...] = (jnp.dot(src.astype(jnp.bfloat16), w_ih_l,
                               preferred_element_type=jnp.float32) + b_ih_l)

        w_hh_l = w_hh_ref[l]                                   # (H, Gp) bf16
        b_hh_l = jnp.broadcast_to(b_hh_ref[l], (Bp, Gp))       # hoisted broadcast
        h0_l = h0_ref[l]                                       # (Bp, H) f32

        # ---- recurrence: only gh = h @ W_hh stays on the serial path --------
        # TODO(synk): hold W_hh in the MXU weight registers across the T steps
        # via pltpu.matmul_push_rhs / matmul_acc_lhs / matmul_pop.
        def step(t, h):
            row = pl.multiple_of(t * Bp, Bp)
            gi_t = gi_ref[pl.ds(row, Bp), :]                   # (Bp, Gp) tile-aligned
            gh = (jnp.dot(h.astype(jnp.bfloat16), w_hh_l,
                          preferred_element_type=jnp.float32) + b_hh_l)
            # gates [r|z|n] live in lanes [0, 3H) of ONE 128-lane tile
            rz = jax.nn.sigmoid(gi_t[:, :2 * H] + gh[:, :2 * H])   # r|z jointly
            r = rz[:, :H]
            z = rz[:, H:2 * H]
            n = jnp.tanh(gi_t[:, 2 * H:3 * H] + r * gh[:, 2 * H:3 * H])
            h_new = (1.0 - z) * n + z * h                      # f32 gate math
            act_ref[pl.ds(row, Bp), :] = h_new
            return h_new

        h_final = lax.fori_loop(0, T, step, h0_l, unroll=unroll)
        state_ref[l] = h_final                                 # written once / layer

    if project:
        # Fused vocab projection: lane-dense (T*Bp, Vp) logits (V padded to 128).
        logits_ref[...] = (jnp.dot(act_ref[...], dense_w_ref[...],
                                   preferred_element_type=jnp.float32)
                           + dense_b_ref[...])


def gru_stack(x, pk, h0, *, project):
    """Run the fused GRU stack kernel. x: (T*Bp, In) f32, h0: (L, Bp, H) f32."""
    L, Bp, H = h0.shape
    TBp = x.shape[0]
    T = TBp // Bp
    Gp = pk["w_hh"].shape[-1]

    args = [x, pk["w_ih0"], pk["b_ih0"], pk["w_ih_rest"], pk["b_ih_rest"],
            pk["w_hh"], pk["b_hh"], h0]
    scratch = []
    if project:
        Vp = pk["dense_w"].shape[-1]
        args += [pk["dense_w"], pk["dense_b"]]
        out_shape = (jax.ShapeDtypeStruct((TBp, Vp), jnp.float32),
                     jax.ShapeDtypeStruct((L, Bp, H), jnp.float32))
        scratch.append(pltpu.VMEM((TBp, H), jnp.float32))      # inter-layer act
    else:
        out_shape = (jax.ShapeDtypeStruct((TBp, H), jnp.float32),
                     jax.ShapeDtypeStruct((L, Bp, H), jnp.float32))
    scratch.append(pltpu.VMEM((TBp, Gp), jnp.float32))         # single gi buffer

    kernel = functools.partial(gru_stack_kernel, seq_len=T, batch_p=Bp, hid=H,
                               num_layers=L, project=project,
                               unroll=min(T, 8))

    # Explicit scoped-VMEM budget from the resident buffers (+ headroom).
    in_bytes = sum(int(a.size) * a.dtype.itemsize for a in args)
    out_bytes = sum(math.prod(s.shape) * 4 for s in out_shape)
    scratch_bytes = TBp * Gp * 4 + (TBp * H * 4 if project else 0)
    vmem_limit = int(min(max(2 * (in_bytes + out_bytes + scratch_bytes)
                             + (4 << 20), 16 << 20), 48 << 20))

    return pl.pallas_call(
        kernel,
        out_shape=out_shape,
        in_specs=[pl.BlockSpec(memory_space=pltpu.MemorySpace.VMEM)] * len(args),
        out_specs=tuple(pl.BlockSpec(memory_space=pltpu.MemorySpace.VMEM)
                        for _ in out_shape),
        scratch_shapes=scratch,
        compiler_params=pltpu.CompilerParams(vmem_limit_bytes=vmem_limit),
    )(*args)


# -------------------- one-time weight packing (packed-gate layout) -----------

def _pack_w(w, gp):
    """torch gate-stacked (3H, In) -> transposed (In, Gp) bf16; the gates
    [r|z|n] occupy the first 3H lanes of one padded lane tile."""
    three_h, in_size = w.shape
    out = jnp.zeros((in_size, gp), jnp.float32).at[:, :three_h].set(w.T)
    return out.astype(jnp.bfloat16)


def _pack_b(b, gp):
    return jnp.zeros((1, gp), jnp.float32).at[0, :b.shape[0]].set(b)


def pack_gru_stack(layers, gp):
    """Pack raw (torch-layout) GRU params once for the Pallas kernel."""
    num_l = len(layers)
    h = layers[0]["w_hh"].shape[1]
    w_ih0 = _pack_w(layers[0]["w_ih"], gp)                     # (In0, Gp) bf16
    b_ih0 = _pack_b(layers[0]["b_ih"], gp)                     # (1, Gp)  f32
    if num_l > 1:
        w_ih_rest = jnp.stack([_pack_w(layers[l]["w_ih"], gp)
                               for l in range(1, num_l)])      # (L-1, H, Gp) bf16
        b_ih_rest = jnp.stack([_pack_b(layers[l]["b_ih"], gp)
                               for l in range(1, num_l)])      # (L-1, 1, Gp) f32
    else:                                                      # dummy (unused) slot
        w_ih_rest = jnp.zeros((1, h, gp), jnp.bfloat16)
        b_ih_rest = jnp.zeros((1, 1, gp), jnp.float32)
    w_hh = jnp.stack([_pack_w(layers[l]["w_hh"], gp)
                      for l in range(num_l)])                  # (L, H, Gp) bf16
    b_hh = jnp.stack([_pack_b(layers[l]["b_hh"], gp)
                      for l in range(num_l)])                  # (L, 1, Gp) f32
    return dict(w_ih0=w_ih0, b_ih0=b_ih0, w_ih_rest=w_ih_rest,
                b_ih_rest=b_ih_rest, w_hh=w_hh, b_hh=b_hh, num_layers=num_l)


def pack_params(params):
    """One-time packing (transpose, gate packing, bf16 cast, vocab padding)."""
    H = params["num_hiddens"]
    V = params["decoder"]["dense_w"].shape[0]
    gp = _round_up(3 * H, LANE)          # all three gates share one padded tile
    vp = _round_up(V, LANE)              # lane-dense logits
    dense_w = jnp.zeros((H, vp), jnp.float32).at[:, :V].set(
        params["decoder"]["dense_w"].T)
    dense_b = jnp.zeros((1, vp), jnp.float32).at[0, :V].set(
        params["decoder"]["dense_b"])
    return dict(
        num_hiddens=H, num_layers=params["num_layers"], vocab_out=V,
        encoder=dict(embedding=params["encoder"]["embedding"],
                     gru=pack_gru_stack(params["encoder"]["gru"], gp)),
        decoder=dict(embedding=params["decoder"]["embedding"],
                     gru=pack_gru_stack(params["decoder"]["gru"], gp),
                     dense_w=dense_w, dense_b=dense_b),
    )


# ------------------------------ module forward -------------------------------

def gru_stack_forward(packed_gru, x_tbe, h0, *, dense=None):
    """x_tbe: (T, B, In) f32, h0: (L, B, H) f32."""
    T, B, in0 = x_tbe.shape
    L, _, H = h0.shape
    Bp = _round_up(max(B, SUBLANE), SUBLANE)

    x_pad = jnp.zeros((T, Bp, in0), jnp.float32).at[:, :B, :].set(x_tbe)
    h0_pad = jnp.zeros((L, Bp, H), jnp.float32).at[:, :B, :].set(h0)

    pk = dict(packed_gru)
    project = dense is not None
    if project:
        pk["dense_w"], pk["dense_b"] = dense

    out_flat, state_p = gru_stack(x_pad.reshape(T * Bp, in0), pk, h0_pad,
                                  project=project)
    state = state_p[:, :B, :]
    out = out_flat.reshape(T, Bp, -1)[:, :B, :]                # (T, B, H or Vp)
    return out, state


def encoder_forward(packed, enc_X):
    """Seq2SeqEncoder: enc_X (B, T) int32 -> (outputs (T,B,H), state (L,B,H))."""
    H, L = packed["num_hiddens"], packed["num_layers"]
    # TODO(synk): data-dependent embedding gather kept as plain-JAX glue; could
    # be fused with the layer-0 projection into a (vocab, Gp) table gather.
    emb = jnp.take(packed["encoder"]["embedding"], enc_X, axis=0)    # (B, T, E)
    x = jnp.transpose(emb, (1, 0, 2)).astype(jnp.float32)            # (T, B, E)
    h0 = jnp.zeros((L, enc_X.shape[0], H), jnp.float32)
    return gru_stack_forward(packed["encoder"]["gru"], x, h0)


def decoder_init_state(enc_outputs):
    # d2l Seq2SeqDecoder.init_state(enc_outputs) -> enc_outputs[1]
    return enc_outputs[1]


def decoder_forward(packed, dec_X, state):
    """Seq2SeqDecoder: dec_X (B, T) int32, state (L,B,H) -> (logits (B,T,V), state)."""
    H, V = packed["num_hiddens"], packed["vocab_out"]
    dec = packed["decoder"]
    emb = jnp.take(dec["embedding"], dec_X, axis=0)                  # (B, T, E)
    x = jnp.transpose(emb, (1, 0, 2)).astype(jnp.float32)            # (T, B, E)
    T, B, _ = x.shape
    # TODO(synk): the context broadcast+concat could be folded into the layer-0
    # projection (split W_ih0 columns: gathered-embedding rows + one (B,Gp)
    # context projection broadcast over T).
    context = jnp.broadcast_to(state[-1][None], (T, B, H))
    x_ctx = jnp.concatenate([x, context], axis=-1)                   # (T, B, E+H)
    out, new_state = gru_stack_forward(dec["gru"], x_ctx, state,
                                       dense=(dec["dense_w"], dec["dense_b"]))
    logits = out[:, :, :V]                                           # (T, B, V)
    return jnp.transpose(logits, (1, 0, 2)), new_state               # (B, T, V)


def encoder_decoder_forward(packed, enc_X, dec_X):
    """Pallas-backed equivalent of EncoderDecoder.forward(enc_X, dec_X)."""
    enc_outputs = encoder_forward(packed, enc_X)
    dec_state = decoder_init_state(enc_outputs)
    return decoder_forward(packed, dec_X, dec_state)


# -------------------------------- parameters --------------------------------

def init_params(key, src_vocab, tgt_vocab, embed_size, num_hiddens, num_layers):
    """Deterministic raw params in PyTorch layout (used by reference + packing)."""
    def gru_layers(key, in0):
        bound = 1.0 / math.sqrt(num_hiddens)
        layers = []
        for layer in range(num_layers):
            in_size = in0 if layer == 0 else num_hiddens
            key, k1, k2, k3, k4 = jax.random.split(key, 5)
            layers.append(dict(
                w_ih=jax.random.uniform(k1, (3 * num_hiddens, in_size),
                                        jnp.float32, -bound, bound),
                w_hh=jax.random.uniform(k2, (3 * num_hiddens, num_hiddens),
                                        jnp.float32, -bound, bound),
                b_ih=jax.random.uniform(k3, (3 * num_hiddens,),
                                        jnp.float32, -bound, bound),
                b_hh=jax.random.uniform(k4, (3 * num_hiddens,),
                                        jnp.float32, -bound, bound),
            ))
        return key, layers

    key, k_e_emb, k_d_emb, k_dw, k_db = jax.random.split(key, 5)
    enc = dict(embedding=jax.random.normal(k_e_emb, (src_vocab, embed_size),
                                           jnp.float32))
    key, enc_layers = gru_layers(key, embed_size)
    enc["gru"] = enc_layers

    dec = dict(embedding=jax.random.normal(k_d_emb, (tgt_vocab, embed_size),
                                           jnp.float32))
    key, dec_layers = gru_layers(key, embed_size + num_hiddens)
    dec["gru"] = dec_layers
    bound = 1.0 / math.sqrt(num_hiddens)
    dec["dense_w"] = jax.random.uniform(k_dw, (tgt_vocab, num_hiddens),
                                        jnp.float32, -bound, bound)
    dec["dense_b"] = jax.random.uniform(k_db, (tgt_vocab,),
                                        jnp.float32, -bound, bound)
    return dict(encoder=enc, decoder=dec,
                num_hiddens=num_hiddens, num_layers=num_layers)


# ----------------------------- pure-JAX reference ----------------------------

def _maybe_q(v, quantize):
    # Mirrors the kernel's intentional bf16 quantization of matmul operands.
    return v.astype(jnp.bfloat16).astype(jnp.float32) if quantize else v


def _gru_layer_ref(x_tbe, w_ih, w_hh, b_ih, b_hh, h0, quantize):
    H = w_hh.shape[1]
    w_ih_t = _maybe_q(w_ih, quantize).T
    w_hh_t = _maybe_q(w_hh, quantize).T

    def step(h, x_t):
        gi = _maybe_q(x_t, quantize) @ w_ih_t + b_ih
        gh = _maybe_q(h, quantize) @ w_hh_t + b_hh
        i_r, i_z, i_n = gi[:, :H], gi[:, H:2 * H], gi[:, 2 * H:]
        h_r, h_z, h_n = gh[:, :H], gh[:, H:2 * H], gh[:, 2 * H:]
        r = jax.nn.sigmoid(i_r + h_r)
        z = jax.nn.sigmoid(i_z + h_z)
        n = jnp.tanh(i_n + r * h_n)
        h_new = (1.0 - z) * n + z * h
        return h_new, h_new

    h_final, outs = lax.scan(step, h0, x_tbe)
    return outs, h_final


def _gru_stack_ref(x_tbe, layers, h0, quantize):
    states, x = [], x_tbe
    for l, lp in enumerate(layers):
        x, h = _gru_layer_ref(x, lp["w_ih"], lp["w_hh"], lp["b_ih"], lp["b_hh"],
                              h0[l], quantize)
        states.append(h)
    return x, jnp.stack(states, axis=0)


def encoder_decoder_ref(params, enc_X, dec_X, quantize=False):
    H, L = params["num_hiddens"], params["num_layers"]
    B = enc_X.shape[0]
    enc = params["encoder"]
    emb = jnp.transpose(jnp.take(enc["embedding"], enc_X, axis=0),
                        (1, 0, 2)).astype(jnp.float32)
    _, enc_state = _gru_stack_ref(emb, enc["gru"],
                                  jnp.zeros((L, B, H), jnp.float32), quantize)
    dec = params["decoder"]
    demb = jnp.transpose(jnp.take(dec["embedding"], dec_X, axis=0),
                         (1, 0, 2)).astype(jnp.float32)
    T = demb.shape[0]
    ctx = jnp.broadcast_to(enc_state[-1][None], (T, B, H))
    out, state = _gru_stack_ref(jnp.concatenate([demb, ctx], axis=-1),
                                dec["gru"], enc_state, quantize)
    logits = out.reshape(T * B, H) @ dec["dense_w"].T + dec["dense_b"]
    V = logits.shape[-1]
    return logits.reshape(T, B, V).transpose(1, 0, 2), state


# ---------------------------------- main -------------------------------------

if __name__ == "__main__":
    src_vocab, tgt_vocab = 50, 50
    embed_size, num_hiddens, num_layers = 16, 32, 2
    batch, enc_len, dec_len = 4, 8, 7

    key = jax.random.PRNGKey(0)
    key, k_enc_tok, k_dec_tok = jax.random.split(key, 3)
    enc_X = jax.random.randint(k_enc_tok, (batch, enc_len), 0, src_vocab, jnp.int32)
    dec_X = jax.random.randint(k_dec_tok, (batch, dec_len), 0, tgt_vocab, jnp.int32)

    params = init_params(key, src_vocab, tgt_vocab, embed_size,
                         num_hiddens, num_layers)
    packed = pack_params(params)          # one-time weight packing / bf16 cast

    logits, state = encoder_decoder_forward(packed, enc_X, dec_X)
    logits = jax.block_until_ready(logits)
    state = jax.block_until_ready(state)

    assert logits.shape == (batch, dec_len, tgt_vocab)
    assert state.shape == (num_layers, batch, num_hiddens)

    # 1) Tight check vs. a reference that mirrors the kernel's intentional bf16
    #    weight / matmul-input quantization (f32 accumulation) -> validates the
    #    kernel implementation itself.
    q_logits, q_state = encoder_decoder_ref(params, enc_X, dec_X, quantize=True)
    assert jnp.allclose(logits, q_logits, atol=5e-3, rtol=5e-3), \
        float(jnp.max(jnp.abs(logits - q_logits)))
    assert jnp.allclose(state, q_state, atol=5e-3, rtol=5e-3), \
        float(jnp.max(jnp.abs(state - q_state)))

    # 2) Looser sanity check vs. pure-f32 module semantics (tolerance loosened
    #    because bf16 MXU weights were adopted per the performance review).
    f_logits, f_state = encoder_decoder_ref(params, enc_X, dec_X, quantize=False)
    assert jnp.allclose(logits, f_logits, atol=1e-1, rtol=1e-1), \
        float(jnp.max(jnp.abs(logits - f_logits)))
    assert jnp.allclose(state, f_state, atol=1e-1, rtol=1e-1), \
        float(jnp.max(jnp.abs(state - f_state)))

    print("KERNEL_OK")
</pallas_src>

<mosaic_0001>
module attributes {stable_mosaic.version = 11 : i64} {
  func.func @gru_stack_kernel(%arg0: memref<64x16xf32, #tpu.memory_space<vmem>>, %arg1: memref<16x128xbf16, #tpu.memory_space<vmem>>, %arg2: memref<1x128xf32, #tpu.memory_space<vmem>>, %arg3: memref<1x32x128xbf16, #tpu.memory_space<vmem>>, %arg4: memref<1x1x128xf32, #tpu.memory_space<vmem>>, %arg5: memref<2x32x128xbf16, #tpu.memory_space<vmem>>, %arg6: memref<2x1x128xf32, #tpu.memory_space<vmem>>, %arg7: memref<2x8x32xf32, #tpu.memory_space<vmem>>, %arg8: memref<64x32xf32, #tpu.memory_space<vmem>>, %arg9: memref<2x8x32xf32, #tpu.memory_space<vmem>>, %arg10: memref<64x128xf32, #tpu.memory_space<vmem>>) attributes {dimension_semantics = [], scalar_prefetch = 0 : i64, scratch_operands = 1 : i64, tpu.core_type = #tpu.core_type<tc>} {
    %c0 = arith.constant 0 : index
    %c0_0 = arith.constant 0 : index
    %0 = vector.load %arg0[%c0, %c0_0] : memref<64x16xf32, #tpu.memory_space<vmem>>, vector<64x16xf32>
    %c0_1 = arith.constant 0 : index
    %c0_2 = arith.constant 0 : index
    %1 = vector.load %arg1[%c0_1, %c0_2] : memref<16x128xbf16, #tpu.memory_space<vmem>>, vector<16x128xbf16>
    %c0_3 = arith.constant 0 : index
    %c0_4 = arith.constant 0 : index
    %2 = vector.load %arg2[%c0_3, %c0_4] : memref<1x128xf32, #tpu.memory_space<vmem>>, vector<1x128xf32>
    %3 = arith.truncf %0 : vector<64x16xf32> to vector<64x16xbf16>
    %cst = arith.constant dense<0.000000e+00> : vector<64x128xf32>
    %4 = tpu.matmul %3, %1, %cst {dimension_numbers = #tpu.dot_dimension_numbers<[1], [0], [0], [1], [0, 0, 1, 1], [], []>} : vector<64x16xbf16>, vector<16x128xbf16>, vector<64x128xf32> -> vector<64x128xf32>
    %5 = vector.broadcast %2 : vector<1x128xf32> to vector<64x128xf32>
    %6 = arith.addf %4, %5 : vector<64x128xf32>
    %c0_5 = arith.constant 0 : index
    %c0_6 = arith.constant 0 : index
    %7 = vector.load %arg10[%c0_5, %c0_6] : memref<64x128xf32, #tpu.memory_space<vmem>>, vector<64x128xf32>
    tpu.vector_store %arg10[%c0_5, %c0_6], %6 {strides = array<i32>} : memref<64x128xf32, #tpu.memory_space<vmem>>, vector<64x128xf32>,
    %c0_7 = arith.constant 0 : index
    %c0_8 = arith.constant 0 : index
    %c0_9 = arith.constant 0 : index
    %8 = vector.load %arg5[%c0_7, %c0_8, %c0_9] : memref<2x32x128xbf16, #tpu.memory_space<vmem>>, vector<1x32x128xbf16>
    %9 = vector.shape_cast %8 : vector<1x32x128xbf16> to vector<32x128xbf16>
    %c0_10 = arith.constant 0 : index
    %c0_11 = arith.constant 0 : index
    %c0_12 = arith.constant 0 : index
    %10 = vector.load %arg6[%c0_10, %c0_11, %c0_12] : memref<2x1x128xf32, #tpu.memory_space<vmem>>, vector<1x1x128xf32>
    %11 = vector.shape_cast %10 : vector<1x1x128xf32> to vector<1x128xf32>
    %12 = vector.shape_cast %11 : vector<1x128xf32> to vector<1x128xf32>
    %13 = vector.broadcast %12 : vector<1x128xf32> to vector<8x128xf32>
    %c0_13 = arith.constant 0 : index
    %c0_14 = arith.constant 0 : index
    %c0_15 = arith.constant 0 : index
    %14 = vector.load %arg7[%c0_13, %c0_14, %c0_15] : memref<2x8x32xf32, #tpu.memory_space<vmem>>, vector<1x8x32xf32>
    %15 = vector.shape_cast %14 : vector<1x8x32xf32> to vector<8x32xf32>
    %c0_i32 = arith.constant 0 : i32
    %c8_i32 = arith.constant 8 : i32
    %16 = arith.muli %c0_i32, %c8_i32 : i32
    %17 = tpu.assume_multiple %16, 8 : i32
    %18 = arith.index_cast %17 : i32 to index
    %c0_16 = arith.constant 0 : index
    %19 = vector.load %arg10[%18, %c0_16] : memref<64x128xf32, #tpu.memory_space<vmem>>, vector<8x128xf32>
    %20 = arith.truncf %15 : vector<8x32xf32> to vector<8x32xbf16>
    %cst_17 = arith.constant dense<0.000000e+00> : vector<8x128xf32>
    %21 = tpu.matmul %20, %9, %cst_17 {dimension_numbers = #tpu.dot_dimension_numbers<[1], [0], [0], [1], [0, 0, 1, 1], [], []>} : vector<8x32xbf16>, vector<32x128xbf16>, vector<8x128xf32> -> vector<8x128xf32>
    %22 = arith.addf %21, %13 : vector<8x128xf32>
    %23 = vector.extract_strided_slice %19 {offsets = [0, 0], sizes = [8, 64], strides = [1, 1]} : vector<8x128xf32> to vector<8x64xf32>
    %24 = vector.extract_strided_slice %22 {offsets = [0, 0], sizes = [8, 64], strides = [1, 1]} : vector<8x128xf32> to vector<8x64xf32>
    %25 = arith.addf %23, %24 : vector<8x64xf32>
    %26 = arith.negf %25 : vector<8x64xf32>
    %27 = math.exp %26 : vector<8x64xf32>
    %cst_18 = arith.constant 1.000000e+00 : f32
    %28 = vector.broadcast %cst_18 : f32 to vector<8x64xf32>
    %29 = arith.addf %28, %27 : vector<8x64xf32>
    %30 = arith.divf %28, %29 : vector<8x64xf32>
    %31 = vector.extract_strided_slice %30 {offsets = [0, 0], sizes = [8, 32], strides = [1, 1]} : vector<8x64xf32> to vector<8x32xf32>
    %32 = vector.extract_strided_slice %30 {offsets = [0, 32], sizes = [8, 32], strides = [1, 1]} : vector<8x64xf32> to vector<8x32xf32>
    %33 = vector.extract_strided_slice %19 {offsets = [0, 64], sizes = [8, 32], strides = [1, 1]} : vector<8x128xf32> to vector<8x32xf32>
    %34 = vector.extract_strided_slice %22 {offsets = [0, 64], sizes = [8, 32], strides = [1, 1]} : vector<8x128xf32> to vector<8x32xf32>
    %35 = arith.mulf %31, %34 : vector<8x32xf32>
    %36 = arith.addf %33, %35 : vector<8x32xf32>
    %37 = math.tanh %36 : vector<8x32xf32>
    %cst_19 = arith.constant 1.000000e+00 : f32
    %38 = vector.broadcast %cst_19 : f32 to vector<8x32xf32>
    %39 = arith.subf %38, %32 : vector<8x32xf32>
    %40 = arith.mulf %39, %37 : vector<8x32xf32>
    %41 = arith.mulf %32, %15 : vector<8x32xf32>
    %42 = arith.addf %40, %41 : vector<8x32xf32>
    %43 = arith.index_cast %17 : i32 to index
    %c0_20 = arith.constant 0 : index
    %44 = vector.load %arg8[%43, %c0_20] : memref<64x32xf32, #tpu.memory_space<vmem>>, vector<8x32xf32>
    tpu.vector_store %arg8[%43, %c0_20], %42 {strides = array<i32>} : memref<64x32xf32, #tpu.memory_space<vmem>>, vector<8x32xf32>,
    %c1_i32 = arith.constant 1 : i32
    %c8_i32_21 = arith.constant 8 : i32
    %45 = arith.muli %c1_i32, %c8_i32_21 : i32
    %46 = tpu.assume_multiple %45, 8 : i32
    %47 = arith.index_cast %46 : i32 to index
    %c0_22 = arith.constant 0 : index
    %48 = vector.load %arg10[%47, %c0_22] : memref<64x128xf32, #tpu.memory_space<vmem>>, vector<8x128xf32>
    %49 = arith.truncf %42 : vector<8x32xf32> to vector<8x32xbf16>
    %cst_23 = arith.constant dense<0.000000e+00> : vector<8x128xf32>
    %50 = tpu.matmul %49, %9, %cst_23 {dimension_numbers = #tpu.dot_dimension_numbers<[1], [0], [0], [1], [0, 0, 1, 1], [], []>} : vector<8x32xbf16>, vector<32x128xbf16>, vector<8x128xf32> -> vector<8x128xf32>
    %51 = arith.addf %50, %13 : vector<8x128xf32>
    %52 = vector.extract_strided_slice %48 {offsets = [0, 0], sizes = [8, 64], strides = [1, 1]} : vector<8x128xf32> to vector<8x64xf32>
    %53 = vector.extract_strided_slice %51 {offsets = [0, 0], sizes = [8, 64], strides = [1, 1]} : vector<8x128xf32> to vector<8x64xf32>
    %54 = arith.addf %52, %53 : vector<8x64xf32>
    %55 = arith.negf %54 : vector<8x64xf32>
    %56 = math.exp %55 : vector<8x64xf32>
    %cst_24 = arith.constant 1.000000e+00 : f32
    %57 = vector.broadcast %cst_24 : f32 to vector<8x64xf32>
    %58 = arith.addf %57, %56 : vector<8x64xf32>
    %59 = arith.divf %57, %58 : vector<8x64xf32>
    %60 = vector.extract_strided_slice %59 {offsets = [0, 0], sizes = [8, 32], strides = [1, 1]} : vector<8x64xf32> to vector<8x32xf32>
    %61 = vector.extract_strided_slice %59 {offsets = [0, 32], sizes = [8, 32], strides = [1, 1]} : vector<8x64xf32> to vector<8x32xf32>
    %62 = vector.extract_strided_slice %48 {offsets = [0, 64], sizes = [8, 32], strides = [1, 1]} : vector<8x128xf32> to vector<8x32xf32>
    %63 = vector.extract_strided_slice %51 {offsets = [0, 64], sizes = [8, 32], strides = [1, 1]} : vector<8x128xf32> to vector<8x32xf32>
    %64 = arith.mulf %60, %63 : vector<8x32xf32>
    %65 = arith.addf %62, %64 : vector<8x32xf32>
    %66 = math.tanh %65 : vector<8x32xf32>
    %cst_25 = arith.constant 1.000000e+00 : f32
    %67 = vector.broadcast %cst_25 : f32 to vector<8x32xf32>
    %68 = arith.subf %67, %61 : vector<8x32xf32>
    %69 = arith.mulf %68, %66 : vector<8x32xf32>
    %70 = arith.mulf %61, %42 : vector<8x32xf32>
    %71 = arith.addf %69, %70 : vector<8x32xf32>
    %72 = arith.index_cast %46 : i32 to index
    %c0_26 = arith.constant 0 : index
    %73 = vector.load %arg8[%72, %c0_26] : memref<64x32xf32, #tpu.memory_space<vmem>>, vector<8x32xf32>
    tpu.vector_store %arg8[%72, %c0_26], %71 {strides = array<i32>} : memref<64x32xf32, #tpu.memory_space<vmem>>, vector<8x32xf32>,
    %c2_i32 = arith.constant 2 : i32
    %c8_i32_27 = arith.constant 8 : i32
    %74 = arith.muli %c2_i32, %c8_i32_27 : i32
    %75 = tpu.assume_multiple %74, 8 : i32
    %76 = arith.index_cast %75 : i32 to index
    %c0_28 = arith.constant 0 : index
    %77 = vector.load %arg10[%76, %c0_28] : memref<64x128xf32, #tpu.memory_space<vmem>>, vector<8x128xf32>
    %78 = arith.truncf %71 : vector<8x32xf32> to vector<8x32xbf16>
    %cst_29 = arith.constant dense<0.000000e+00> : vector<8x128xf32>
    %79 = tpu.matmul %78, %9, %cst_29 {dimension_numbers = #tpu.dot_dimension_numbers<[1], [0], [0], [1], [0, 0, 1, 1], [], []>} : vector<8x32xbf16>, vector<32x128xbf16>, vector<8x128xf32> -> vector<8x128xf32>
    %80 = arith.addf %79, %13 : vector<8x128xf32>
    %81 = vector.extract_strided_slice %77 {offsets = [0, 0], sizes = [8, 64], strides = [1, 1]} : vector<8x128xf32> to vector<8x64xf32>
    %82 = vector.extract_strided_slice %80 {offsets = [0, 0], sizes = [8, 64], strides = [1, 1]} : vector<8x128xf32> to vector<8x64xf32>
    %83 = arith.addf %81, %82 : vector<8x64xf32>
    %84 = arith.negf %83 : vector<8x64xf32>
    %85 = math.exp %84 : vector<8x64xf32>
    %cst_30 = arith.constant 1.000000e+00 : f32
    %86 = vector.broadcast %cst_30 : f32 to vector<8x64xf32>
    %87 = arith.addf %86, %85 : vector<8x64xf32>
    %88 = arith.divf %86, %87 : vector<8x64xf32>
    %89 = vector.extract_strided_slice %88 {offsets = [0, 0], sizes = [8, 32], strides = [1, 1]} : vector<8x64xf32> to vector<8x32xf32>
    %90 = vector.extract_strided_slice %88 {offsets = [0, 32], sizes = [8, 32], strides = [1, 1]} : vector<8x64xf32> to vector<8x32xf32>
    %91 = vector.extract_strided_slice %77 {offsets = [0, 64], sizes = [8, 32], strides = [1, 1]} : vector<8x128xf32> to vector<8x32xf32>
    %92 = vector.extract_strided_slice %80 {offsets = [0, 64], sizes = [8, 32], strides = [1, 1]} : vector<8x128xf32> to vector<8x32xf32>
    %93 = arith.mulf %89, %92 : vector<8x32xf32>
    %94 = arith.addf %91, %93 : vector<8x32xf32>
    %95 = math.tanh %94 : vector<8x32xf32>
    %cst_31 = arith.constant 1.000000e+00 : f32
    %96 = vector.broadcast %cst_31 : f32 to vector<8x32xf32>
    %97 = arith.subf %96, %90 : vector<8x32xf32>
    %98 = arith.mulf %97, %95 : vector<8x32xf32>
    %99 = arith.mulf %90, %71 : vector<8x32xf32>
    %100 = arith.addf %98, %99 : vector<8x32xf32>
    %101 = arith.index_cast %75 : i32 to index
    %c0_32 = arith.constant 0 : index
    %102 = vector.load %arg8[%101, %c0_32] : memref<64x32xf32, #tpu.memory_space<vmem>>, vector<8x32xf32>
    tpu.vector_store %arg8[%101, %c0_32], %100 {strides = array<i32>} : memref<64x32xf32, #tpu.memory_space<vmem>>, vector<8x32xf32>,
    %c3_i32 = arith.constant 3 : i32
    %c8_i32_33 = arith.constant 8 : i32
    %103 = arith.muli %c3_i32, %c8_i32_33 : i32
    %104 = tpu.assume_multiple %103, 8 : i32
    %105 = arith.index_cast %104 : i32 to index
    %c0_34 = arith.constant 0 : index
    %106 = vector.load %arg10[%105, %c0_34] : memref<64x128xf32, #tpu.memory_space<vmem>>, vector<8x128xf32>
    %107 = arith.truncf %100 : vector<8x32xf32> to vector<8x32xbf16>
    %cst_35 = arith.constant dense<0.000000e+00> : vector<8x128xf32>
    %108 = tpu.matmul %107, %9, %cst_35 {dimension_numbers = #tpu.dot_dimension_numbers<[1], [0], [0], [1], [0, 0, 1, 1], [], []>} : vector<8x32xbf16>, vector<32x128xbf16>, vector<8x128xf32> -> vector<8x128xf32>
    %109 = arith.addf %108, %13 : vector<8x128xf32>
    %110 = vector.extract_strided_slice %106 {offsets = [0, 0], sizes = [8, 64], strides = [1, 1]} : vector<8x128xf32> to vector<8x64xf32>
    %111 = vector.extract_strided_slice %109 {offsets = [0, 0], sizes = [8, 64], strides = [1, 1]} : vector<8x128xf32> to vector<8x64xf32>
    %112 = arith.addf %110, %111 : vector<8x64xf32>
    %113 = arith.negf %112 : vector<8x64xf32>
    %114 = math.exp %113 : vector<8x64xf32>
    %cst_36 = arith.constant 1.000000e+00 : f32
    %115 = vector.broadcast %cst_36 : f32 to vector<8x64xf32>
    %116 = arith.addf %115, %114 : vector<8x64xf32>
    %117 = arith.divf %115, %116 : vector<8x64xf32>
    %118 = vector.extract_strided_slice %117 {offsets = [0, 0], sizes = [8, 32], strides = [1, 1]} : vector<8x64xf32> to vector<8x32xf32>
    %119 = vector.extract_strided_slice %117 {offsets = [0, 32], sizes = [8, 32], strides = [1, 1]} : vector<8x64xf32> to vector<8x32xf32>
    %120 = vector.extract_strided_slice %106 {offsets = [0, 64], sizes = [8, 32], strides = [1, 1]} : vector<8x128xf32> to vector<8x32xf32>
    %121 = vector.extract_strided_slice %109 {offsets = [0, 64], sizes = [8, 32], strides = [1, 1]} : vector<8x128xf32> to vector<8x32xf32>
    %122 = arith.mulf %118, %121 : vector<8x32xf32>
    %123 = arith.addf %120, %122 : vector<8x32xf32>
    %124 = math.tanh %123 : vector<8x32xf32>
    %cst_37 = arith.constant 1.000000e+00 : f32
    %125 = vector.broadcast %cst_37 : f32 to vector<8x32xf32>
    %126 = arith.subf %125, %119 : vector<8x32xf32>
    %127 = arith.mulf %126, %124 : vector<8x32xf32>
    %128 = arith.mulf %119, %100 : vector<8x32xf32>
    %129 = arith.addf %127, %128 : vector<8x32xf32>
    %130 = arith.index_cast %104 : i32 to index
    %c0_38 = arith.constant 0 : index
    %131 = vector.load %arg8[%130, %c0_38] : memref<64x32xf32, #tpu.memory_space<vmem>>, vector<8x32xf32>
    tpu.vector_store %arg8[%130, %c0_38], %129 {strides = array<i32>} : memref<64x32xf32, #tpu.memory_space<vmem>>, vector<8x32xf32>,
    %c4_i32 = arith.constant 4 : i32
    %c8_i32_39 = arith.constant 8 : i32
    %132 = arith.muli %c4_i32, %c8_i32_39 : i32
    %133 = tpu.assume_multiple %132, 8 : i32
    %134 = arith.index_cast %133 : i32 to index
    %c0_40 = arith.constant 0 : index
    %135 = vector.load %arg10[%134, %c0_40] : memref<64x128xf32, #tpu.memory_space<vmem>>, vector<8x128xf32>
    %136 = arith.truncf %129 : vector<8x32xf32> to vector<8x32xbf16>
    %cst_41 = arith.constant dense<0.000000e+00> : vector<8x128xf32>
    %137 = tpu.matmul %136, %9, %cst_41 {dimension_numbers = #tpu.dot_dimension_numbers<[1], [0], [0], [1], [0, 0, 1, 1], [], []>} : vector<8x32xbf16>, vector<32x128xbf16>, vector<8x128xf32> -> vector<8x128xf32>
    %138 = arith.addf %137, %13 : vector<8x128xf32>
    %139 = vector.extract_strided_slice %135 {offsets = [0, 0], sizes = [8, 64], strides = [1, 1]} : vector<8x128xf32> to vector<8x64xf32>
    %140 = vector.extract_strided_slice %138 {offsets = [0, 0], sizes = [8, 64], strides = [1, 1]} : vector<8x128xf32> to vector<8x64xf32>
    %141 = arith.addf %139, %140 : vector<8x64xf32>
    %142 = arith.negf %141 : vector<8x64xf32>
    %143 = math.exp %142 : vector<8x64xf32>
    %cst_42 = arith.constant 1.000000e+00 : f32
    %144 = vector.broadcast %cst_42 : f32 to vector<8x64xf32>
    %145 = arith.addf %144, %143 : vector<8x64xf32>
    %146 = arith.divf %144, %145 : vector<8x64xf32>
    %147 = vector.extract_strided_slice %146 {offsets = [0, 0], sizes = [8, 32], strides = [1, 1]} : vector<8x64xf32> to vector<8x32xf32>
    %148 = vector.extract_strided_slice %146 {offsets = [0, 32], sizes = [8, 32], strides = [1, 1]} : vector<8x64xf32> to vector<8x32xf32>
    %149 = vector.extract_strided_slice %135 {offsets = [0, 64], sizes = [8, 32], strides = [1, 1]} : vector<8x128xf32> to vector<8x32xf32>
    %150 = vector.extract_strided_slice %138 {offsets = [0, 64], sizes = [8, 32], strides = [1, 1]} : vector<8x128xf32> to vector<8x32xf32>
    %151 = arith.mulf %147, %150 : vector<8x32xf32>
    %152 = arith.addf %149, %151 : vector<8x32xf32>
    %153 = math.tanh %152 : vector<8x32xf32>
    %cst_43 = arith.constant 1.000000e+00 : f32
    %154 = vector.broadcast %cst_43 : f32 to vector<8x32xf32>
    %155 = arith.subf %154, %148 : vector<8x32xf32>
    %156 = arith.mulf %155, %153 : vector<8x32xf32>
    %157 = arith.mulf %148, %129 : vector<8x32xf32>
    %158 = arith.addf %156, %157 : vector<8x32xf32>
    %159 = arith.index_cast %133 : i32 to index
    %c0_44 = arith.constant 0 : index
    %160 = vector.load %arg8[%159, %c0_44] : memref<64x32xf32, #tpu.memory_space<vmem>>, vector<8x32xf32>
    tpu.vector_store %arg8[%159, %c0_44], %158 {strides = array<i32>} : memref<64x32xf32, #tpu.memory_space<vmem>>, vector<8x32xf32>,
    %c5_i32 = arith.constant 5 : i32
    %c8_i32_45 = arith.constant 8 : i32
    %161 = arith.muli %c5_i32, %c8_i32_45 : i32
    %162 = tpu.assume_multiple %161, 8 : i32
    %163 = arith.index_cast %162 : i32 to index
    %c0_46 = arith.constant 0 : index
    %164 = vector.load %arg10[%163, %c0_46] : memref<64x128xf32, #tpu.memory_space<vmem>>, vector<8x128xf32>
    %165 = arith.truncf %158 : vector<8x32xf32> to vector<8x32xbf16>
    %cst_47 = arith.constant dense<0.000000e+00> : vector<8x128xf32>
    %166 = tpu.matmul %165, %9, %cst_47 {dimension_numbers = #tpu.dot_dimension_numbers<[1], [0], [0], [1], [0, 0, 1, 1], [], []>} : vector<8x32xbf16>, vector<32x128xbf16>, vector<8x128xf32> -> vector<8x128xf32>
    %167 = arith.addf %166, %13 : vector<8x128xf32>
    %168 = vector.extract_strided_slice %164 {offsets = [0, 0], sizes = [8, 64], strides = [1, 1]} : vector<8x128xf32> to vector<8x64xf32>
    %169 = vector.extract_strided_slice %167 {offsets = [0, 0], sizes = [8, 64], strides = [1, 1]} : vector<8x128xf32> to vector<8x64xf32>
    %170 = arith.addf %168, %169 : vector<8x64xf32>
    %171 = arith.negf %170 : vector<8x64xf32>
    %172 = math.exp %171 : vector<8x64xf32>
    %cst_48 = arith.constant 1.000000e+00 : f32
    %173 = vector.broadcast %cst_48 : f32 to vector<8x64xf32>
    %174 = arith.addf %173, %172 : vector<8x64xf32>
    %175 = arith.divf %173, %174 : vector<8x64xf32>
    %176 = vector.extract_strided_slice %175 {offsets = [0, 0], sizes = [8, 32], strides = [1, 1]} : vector<8x64xf32> to vector<8x32xf32>
    %177 = vector.extract_strided_slice %175 {offsets = [0, 32], sizes = [8, 32], strides = [1, 1]} : vector<8x64xf32> to vector<8x32xf32>
    %178 = vector.extract_strided_slice %164 {offsets = [0, 64], sizes = [8, 32], strides = [1, 1]} : vector<8x128xf32> to vector<8x32xf32>
    %179 = vector.extract_strided_slice %167 {offsets = [0, 64], sizes = [8, 32], strides = [1, 1]} : vector<8x128xf32> to vector<8x32xf32>
    %180 = arith.mulf %176, %179 : vector<8x32xf32>
    %181 = arith.addf %178, %180 : vector<8x32xf32>
    %182 = math.tanh %181 : vector<8x32xf32>
    %cst_49 = arith.constant 1.000000e+00 : f32
    %183 = vector.broadcast %cst_49 : f32 to vector<8x32xf32>
    %184 = arith.subf %183, %177 : vector<8x32xf32>
    %185 = arith.mulf %184, %182 : vector<8x32xf32>
    %186 = arith.mulf %177, %158 : vector<8x32xf32>
    %187 = arith.addf %185, %186 : vector<8x32xf32>
    %188 = arith.index_cast %162 : i32 to index
    %c0_50 = arith.constant 0 : index
    %189 = vector.load %arg8[%188, %c0_50] : memref<64x32xf32, #tpu.memory_space<vmem>>, vector<8x32xf32>
    tpu.vector_store %arg8[%188, %c0_50], %187 {strides = array<i32>} : memref<64x32xf32, #tpu.memory_space<vmem>>, vector<8x32xf32>,
    %c6_i32 = arith.constant 6 : i32
    %c8_i32_51 = arith.constant 8 : i32
    %190 = arith.muli %c6_i32, %c8_i32_51 : i32
    %191 = tpu.assume_multiple %190, 8 : i32
    %192 = arith.index_cast %191 : i32 to index
    %c0_52 = arith.constant 0 : index
    %193 = vector.load %arg10[%192, %c0_52] : memref<64x128xf32, #tpu.memory_space<vmem>>, vector<8x128xf32>
    %194 = arith.truncf %187 : vector<8x32xf32> to vector<8x32xbf16>
    %cst_53 = arith.constant dense<0.000000e+00> : vector<8x128xf32>
    %195 = tpu.matmul %194, %9, %cst_53 {dimension_numbers = #tpu.dot_dimension_numbers<[1], [0], [0], [1], [0, 0, 1, 1], [], []>} : vector<8x32xbf16>, vector<32x128xbf16>, vector<8x128xf32> -> vector<8x128xf32>
    %196 = arith.addf %195, %13 : vector<8x128xf32>
    %197 = vector.extract_strided_slice %193 {offsets = [0, 0], sizes = [8, 64], strides = [1, 1]} : vector<8x128xf32> to vector<8x64xf32>
    %198 = vector.extract_strided_slice %196 {offsets = [0, 0], sizes = [8, 64], strides = [1, 1]} : vector<8x128xf32> to vector<8x64xf32>
    %199 = arith.addf %197, %198 : vector<8x64xf32>
    %200 = arith.negf %199 : vector<8x64xf32>
    %201 = math.exp %200 : vector<8x64xf32>
    %cst_54 = arith.constant 1.000000e+00 : f32
    %202 = vector.broadcast %cst_54 : f32 to vector<8x64xf32>
    %203 = arith.addf %202, %201 : vector<8x64xf32>
    %204 = arith.divf %202, %203 : vector<8x64xf32>
    %205 = vector.extract_strided_slice %204 {offsets = [0, 0], sizes = [8, 32], strides = [1, 1]} : vector<8x64xf32> to vector<8x32xf32>
    %206 = vector.extract_strided_slice %204 {offsets = [0, 32], sizes = [8, 32], strides = [1, 1]} : vector<8x64xf32> to vector<8x32xf32>
    %207 = vector.extract_strided_slice %193 {offsets = [0, 64], sizes = [8, 32], strides = [1, 1]} : vector<8x128xf32> to vector<8x32xf32>
    %208 = vector.extract_strided_slice %196 {offsets = [0, 64], sizes = [8, 32], strides = [1, 1]} : vector<8x128xf32> to vector<8x32xf32>
    %209 = arith.mulf %205, %208 : vector<8x32xf32>
    %210 = arith.addf %207, %209 : vector<8x32xf32>
    %211 = math.tanh %210 : vector<8x32xf32>
    %cst_55 = arith.constant 1.000000e+00 : f32
    %212 = vector.broadcast %cst_55 : f32 to vector<8x32xf32>
    %213 = arith.subf %212, %206 : vector<8x32xf32>
    %214 = arith.mulf %213, %211 : vector<8x32xf32>
    %215 = arith.mulf %206, %187 : vector<8x32xf32>
    %216 = arith.addf %214, %215 : vector<8x32xf32>
    %217 = arith.index_cast %191 : i32 to index
    %c0_56 = arith.constant 0 : index
    %218 = vector.load %arg8[%217, %c0_56] : memref<64x32xf32, #tpu.memory_space<vmem>>, vector<8x32xf32>
    tpu.vector_store %arg8[%217, %c0_56], %216 {strides = array<i32>} : memref<64x32xf32, #tpu.memory_space<vmem>>, vector<8x32xf32>,
    %c7_i32 = arith.constant 7 : i32
    %c8_i32_57 = arith.constant 8 : i32
    %219 = arith.muli %c7_i32, %c8_i32_57 : i32
    %220 = tpu.assume_multiple %219, 8 : i32
    %221 = arith.index_cast %220 : i32 to index
    %c0_58 = arith.constant 0 : index
    %222 = vector.load %arg10[%221, %c0_58] : memref<64x128xf32, #tpu.memory_space<vmem>>, vector<8x128xf32>
    %223 = arith.truncf %216 : vector<8x32xf32> to vector<8x32xbf16>
    %cst_59 = arith.constant dense<0.000000e+00> : vector<8x128xf32>
    %224 = tpu.matmul %223, %9, %cst_59 {dimension_numbers = #tpu.dot_dimension_numbers<[1], [0], [0], [1], [0, 0, 1, 1], [], []>} : vector<8x32xbf16>, vector<32x128xbf16>, vector<8x128xf32> -> vector<8x128xf32>
    %225 = arith.addf %224, %13 : vector<8x128xf32>
    %226 = vector.extract_strided_slice %222 {offsets = [0, 0], sizes = [8, 64], strides = [1, 1]} : vector<8x128xf32> to vector<8x64xf32>
    %227 = vector.extract_strided_slice %225 {offsets = [0, 0], sizes = [8, 64], strides = [1, 1]} : vector<8x128xf32> to vector<8x64xf32>
    %228 = arith.addf %226, %227 : vector<8x64xf32>
    %229 = arith.negf %228 : vector<8x64xf32>
    %230 = math.exp %229 : vector<8x64xf32>
    %cst_60 = arith.constant 1.000000e+00 : f32
    %231 = vector.broadcast %cst_60 : f32 to vector<8x64xf32>
    %232 = arith.addf %231, %230 : vector<8x64xf32>
    %233 = arith.divf %231, %232 : vector<8x64xf32>
    %234 = vector.extract_strided_slice %233 {offsets = [0, 0], sizes = [8, 32], strides = [1, 1]} : vector<8x64xf32> to vector<8x32xf32>
    %235 = vector.extract_strided_slice %233 {offsets = [0, 32], sizes = [8, 32], strides = [1, 1]} : vector<8x64xf32> to vector<8x32xf32>
    %236 = vector.extract_strided_slice %222 {offsets = [0, 64], sizes = [8, 32], strides = [1, 1]} : vector<8x128xf32> to vector<8x32xf32>
    %237 = vector.extract_strided_slice %225 {offsets = [0, 64], sizes = [8, 32], strides = [1, 1]} : vector<8x128xf32> to vector<8x32xf32>
    %238 = arith.mulf %234, %237 : vector<8x32xf32>
    %239 = arith.addf %236, %238 : vector<8x32xf32>
    %240 = math.tanh %239 : vector<8x32xf32>
    %cst_61 = arith.constant 1.000000e+00 : f32
    %241 = vector.broadcast %cst_61 : f32 to vector<8x32xf32>
    %242 = arith.subf %241, %235 : vector<8x32xf32>
    %243 = arith.mulf %242, %240 : vector<8x32xf32>
    %244 = arith.mulf %235, %216 : vector<8x32xf32>
    %245 = arith.addf %243, %244 : vector<8x32xf32>
    %246 = arith.index_cast %220 : i32 to index
    %c0_62 = arith.constant 0 : index
    %247 = vector.load %arg8[%246, %c0_62] : memref<64x32xf32, #tpu.memory_space<vmem>>, vector<8x32xf32>
    tpu.vector_store %arg8[%246, %c0_62], %245 {strides = array<i32>} : memref<64x32xf32, #tpu.memory_space<vmem>>, vector<8x32xf32>,
    %c8_i32_63 = arith.constant 8 : i32
    %c0_64 = arith.constant 0 : index
    %c0_65 = arith.constant 0 : index
    %c0_66 = arith.constant 0 : index
    %248 = vector.load %arg9[%c0_64, %c0_65, %c0_66] : memref<2x8x32xf32, #tpu.memory_space<vmem>>, vector<1x8x32xf32>
    %249 = vector.shape_cast %248 : vector<1x8x32xf32> to vector<8x32xf32>
    %250 = vector.shape_cast %245 : vector<8x32xf32> to vector<1x8x32xf32>
    tpu.vector_store %arg9[%c0_64, %c0_65, %c0_66], %250 {strides = array<i32>} : memref<2x8x32xf32, #tpu.memory_space<vmem>>, vector<1x8x32xf32>,
    %c0_67 = arith.constant 0 : index
    %c0_68 = arith.constant 0 : index
    %251 = vector.load %arg8[%c0_67, %c0_68] : memref<64x32xf32, #tpu.memory_space<vmem>>, vector<64x32xf32>
    %c0_69 = arith.constant 0 : index
    %c0_70 = arith.constant 0 : index
    %c0_71 = arith.constant 0 : index
    %252 = vector.load %arg3[%c0_69, %c0_70, %c0_71] : memref<1x32x128xbf16, #tpu.memory_space<vmem>>, vector<1x32x128xbf16>
    %253 = vector.shape_cast %252 : vector<1x32x128xbf16> to vector<32x128xbf16>
    %c0_72 = arith.constant 0 : index
    %c0_73 = arith.constant 0 : index
    %c0_74 = arith.constant 0 : index
    %254 = vector.load %arg4[%c0_72, %c0_73, %c0_74] : memref<1x1x128xf32, #tpu.memory_space<vmem>>, vector<1x1x128xf32>
    %255 = vector.shape_cast %254 : vector<1x1x128xf32> to vector<1x128xf32>
    %256 = arith.truncf %251 : vector<64x32xf32> to vector<64x32xbf16>
    %cst_75 = arith.constant dense<0.000000e+00> : vector<64x128xf32>
    %257 = tpu.matmul %256, %253, %cst_75 {dimension_numbers = #tpu.dot_dimension_numbers<[1], [0], [0], [1], [0, 0, 1, 1], [], []>} : vector<64x32xbf16>, vector<32x128xbf16>, vector<64x128xf32> -> vector<64x128xf32>
    %258 = vector.broadcast %255 : vector<1x128xf32> to vector<64x128xf32>
    %259 = arith.addf %257, %258 : vector<64x128xf32>
    %c0_76 = arith.constant 0 : index
    %c0_77 = arith.constant 0 : index
    %260 = vector.load %arg10[%c0_76, %c0_77] : memref<64x128xf32, #tpu.memory_space<vmem>>, vector<64x128xf32>
    tpu.vector_store %arg10[%c0_76, %c0_77], %259 {strides = array<i32>} : memref<64x128xf32, #tpu.memory_space<vmem>>, vector<64x128xf32>,
    %c1 = arith.constant 1 : index
    %c0_78 = arith.constant 0 : index
    %c0_79 = arith.constant 0 : index
    %261 = vector.load %arg5[%c1, %c0_78, %c0_79] : memref<2x32x128xbf16, #tpu.memory_space<vmem>>, vector<1x32x128xbf16>
    %262 = vector.shape_cast %261 : vector<1x32x128xbf16> to vector<32x128xbf16>
    %c1_80 = arith.constant 1 : index
    %c0_81 = arith.constant 0 : index
    %c0_82 = arith.constant 0 : index
    %263 = vector.load %arg6[%c1_80, %c0_81, %c0_82] : memref<2x1x128xf32, #tpu.memory_space<vmem>>, vector<1x1x128xf32>
    %264 = vector.shape_cast %263 : vector<1x1x128xf32> to vector<1x128xf32>
    %265 = vector.shape_cast %264 : vector<1x128xf32> to vector<1x128xf32>
    %266 = vector.broadcast %265 : vector<1x128xf32> to vector<8x128xf32>
    %c1_83 = arith.constant 1 : index
    %c0_84 = arith.constant 0 : index
    %c0_85 = arith.constant 0 : index
    %267 = vector.load %arg7[%c1_83, %c0_84, %c0_85] : memref<2x8x32xf32, #tpu.memory_space<vmem>>, vector<1x8x32xf32>
    %268 = vector.shape_cast %267 : vector<1x8x32xf32> to vector<8x32xf32>
    %c0_i32_86 = arith.constant 0 : i32
    %c8_i32_87 = arith.constant 8 : i32
    %269 = arith.muli %c0_i32_86, %c8_i32_87 : i32
    %270 = tpu.assume_multiple %269, 8 : i32
    %271 = arith.index_cast %270 : i32 to index
    %c0_88 = arith.constant 0 : index
    %272 = vector.load %arg10[%271, %c0_88] : memref<64x128xf32, #tpu.memory_space<vmem>>, vector<8x128xf32>
    %273 = arith.truncf %268 : vector<8x32xf32> to vector<8x32xbf16>
    %cst_89 = arith.constant dense<0.000000e+00> : vector<8x128xf32>
    %274 = tpu.matmul %273, %262, %cst_89 {dimension_numbers = #tpu.dot_dimension_numbers<[1], [0], [0], [1], [0, 0, 1, 1], [], []>} : vector<8x32xbf16>, vector<32x128xbf16>, vector<8x128xf32> -> vector<8x128xf32>
    %275 = arith.addf %274, %266 : vector<8x128xf32>
    %276 = vector.extract_strided_slice %272 {offsets = [0, 0], sizes = [8, 64], strides = [1, 1]} : vector<8x128xf32> to vector<8x64xf32>
    %277 = vector.extract_strided_slice %275 {offsets = [0, 0], sizes = [8, 64], strides = [1, 1]} : vector<8x128xf32> to vector<8x64xf32>
    %278 = arith.addf %276, %277 : vector<8x64xf32>
    %279 = arith.negf %278 : vector<8x64xf32>
    %280 = math.exp %279 : vector<8x64xf32>
    %cst_90 = arith.constant 1.000000e+00 : f32
    %281 = vector.broadcast %cst_90 : f32 to vector<8x64xf32>
    %282 = arith.addf %281, %280 : vector<8x64xf32>
    %283 = arith.divf %281, %282 : vector<8x64xf32>
    %284 = vector.extract_strided_slice %283 {offsets = [0, 0], sizes = [8, 32], strides = [1, 1]} : vector<8x64xf32> to vector<8x32xf32>
    %285 = vector.extract_strided_slice %283 {offsets = [0, 32], sizes = [8, 32], strides = [1, 1]} : vector<8x64xf32> to vector<8x32xf32>
    %286 = vector.extract_strided_slice %272 {offsets = [0, 64], sizes = [8, 32], strides = [1, 1]} : vector<8x128xf32> to vector<8x32xf32>
    %287 = vector.extract_strided_slice %275 {offsets = [0, 64], sizes = [8, 32], strides = [1, 1]} : vector<8x128xf32> to vector<8x32xf32>
    %288 = arith.mulf %284, %287 : vector<8x32xf32>
    %289 = arith.addf %286, %288 : vector<8x32xf32>
    %290 = math.tanh %289 : vector<8x32xf32>
    %cst_91 = arith.constant 1.000000e+00 : f32
    %291 = vector.broadcast %cst_91 : f32 to vector<8x32xf32>
    %292 = arith.subf %291, %285 : vector<8x32xf32>
    %293 = arith.mulf %292, %290 : vector<8x32xf32>
    %294 = arith.mulf %285, %268 : vector<8x32xf32>
    %295 = arith.addf %293, %294 : vector<8x32xf32>
    %296 = arith.index_cast %270 : i32 to index
    %c0_92 = arith.constant 0 : index
    %297 = vector.load %arg8[%296, %c0_92] : memref<64x32xf32, #tpu.memory_space<vmem>>, vector<8x32xf32>
    tpu.vector_store %arg8[%296, %c0_92], %295 {strides = array<i32>} : memref<64x32xf32, #tpu.memory_space<vmem>>, vector<8x32xf32>,
    %c1_i32_93 = arith.constant 1 : i32
    %c8_i32_94 = arith.constant 8 : i32
    %298 = arith.muli %c1_i32_93, %c8_i32_94 : i32
    %299 = tpu.assume_multiple %298, 8 : i32
    %300 = arith.index_cast %299 : i32 to index
    %c0_95 = arith.constant 0 : index
    %301 = vector.load %arg10[%300, %c0_95] : memref<64x128xf32, #tpu.memory_space<vmem>>, vector<8x128xf32>
    %302 = arith.truncf %295 : vector<8x32xf32> to vector<8x32xbf16>
    %cst_96 = arith.constant dense<0.000000e+00> : vector<8x128xf32>
    %303 = tpu.matmul %302, %262, %cst_96 {dimension_numbers = #tpu.dot_dimension_numbers<[1], [0], [0], [1], [0, 0, 1, 1], [], []>} : vector<8x32xbf16>, vector<32x128xbf16>, vector<8x128xf32> -> vector<8x128xf32>
    %304 = arith.addf %303, %266 : vector<8x128xf32>
    %305 = vector.extract_strided_slice %301 {offsets = [0, 0], sizes = [8, 64], strides = [1, 1]} : vector<8x128xf32> to vector<8x64xf32>
    %306 = vector.extract_strided_slice %304 {offsets = [0, 0], sizes = [8, 64], strides = [1, 1]} : vector<8x128xf32> to vector<8x64xf32>
    %307 = arith.addf %305, %306 : vector<8x64xf32>
    %308 = arith.negf %307 : vector<8x64xf32>
    %309 = math.exp %308 : vector<8x64xf32>
    %cst_97 = arith.constant 1.000000e+00 : f32
    %310 = vector.broadcast %cst_97 : f32 to vector<8x64xf32>
    %311 = arith.addf %310, %309 : vector<8x64xf32>
    %312 = arith.divf %310, %311 : vector<8x64xf32>
    %313 = vector.extract_strided_slice %312 {offsets = [0, 0], sizes = [8, 32], strides = [1, 1]} : vector<8x64xf32> to vector<8x32xf32>
    %314 = vector.extract_strided_slice %312 {offsets = [0, 32], sizes = [8, 32], strides = [1, 1]} : vector<8x64xf32> to vector<8x32xf32>
    %315 = vector.extract_strided_slice %301 {offsets = [0, 64], sizes = [8, 32], strides = [1, 1]} : vector<8x128xf32> to vector<8x32xf32>
    %316 = vector.extract_strided_slice %304 {offsets = [0, 64], sizes = [8, 32], strides = [1, 1]} : vector<8x128xf32> to vector<8x32xf32>
    %317 = arith.mulf %313, %316 : vector<8x32xf32>
    %318 = arith.addf %315, %317 : vector<8x32xf32>
    %319 = math.tanh %318 : vector<8x32xf32>
    %cst_98 = arith.constant 1.000000e+00 : f32
    %320 = vector.broadcast %cst_98 : f32 to vector<8x32xf32>
    %321 = arith.subf %320, %314 : vector<8x32xf32>
    %322 = arith.mulf %321, %319 : vector<8x32xf32>
    %323 = arith.mulf %314, %295 : vector<8x32xf32>
    %324 = arith.addf %322, %323 : vector<8x32xf32>
    %325 = arith.index_cast %299 : i32 to index
    %c0_99 = arith.constant 0 : index
    %326 = vector.load %arg8[%325, %c0_99] : memref<64x32xf32, #tpu.memory_space<vmem>>, vector<8x32xf32>
    tpu.vector_store %arg8[%325, %c0_99], %324 {strides = array<i32>} : memref<64x32xf32, #tpu.memory_space<vmem>>, vector<8x32xf32>,
    %c2_i32_100 = arith.constant 2 : i32
    %c8_i32_101 = arith.constant 8 : i32
    %327 = arith.muli %c2_i32_100, %c8_i32_101 : i32
    %328 = tpu.assume_multiple %327, 8 : i32
    %329 = arith.index_cast %328 : i32 to index
    %c0_102 = arith.constant 0 : index
    %330 = vector.load %arg10[%329, %c0_102] : memref<64x128xf32, #tpu.memory_space<vmem>>, vector<8x128xf32>
    %331 = arith.truncf %324 : vector<8x32xf32> to vector<8x32xbf16>
    %cst_103 = arith.constant dense<0.000000e+00> : vector<8x128xf32>
    %332 = tpu.matmul %331, %262, %cst_103 {dimension_numbers = #tpu.dot_dimension_numbers<[1], [0], [0], [1], [0, 0, 1, 1], [], []>} : vector<8x32xbf16>, vector<32x128xbf16>, vector<8x128xf32> -> vector<8x128xf32>
    %333 = arith.addf %332, %266 : vector<8x128xf32>
    %334 = vector.extract_strided_slice %330 {offsets = [0, 0], sizes = [8, 64], strides = [1, 1]} : vector<8x128xf32> to vector<8x64xf32>
    %335 = vector.extract_strided_slice %333 {offsets = [0, 0], sizes = [8, 64], strides = [1, 1]} : vector<8x128xf32> to vector<8x64xf32>
    %336 = arith.addf %334, %335 : vector<8x64xf32>
    %337 = arith.negf %336 : vector<8x64xf32>
    %338 = math.exp %337 : vector<8x64xf32>
    %cst_104 = arith.constant 1.000000e+00 : f32
    %339 = vector.broadcast %cst_104 : f32 to vector<8x64xf32>
    %340 = arith.addf %339, %338 : vector<8x64xf32>
    %341 = arith.divf %339, %340 : vector<8x64xf32>
    %342 = vector.extract_strided_slice %341 {offsets = [0, 0], sizes = [8, 32], strides = [1, 1]} : vector<8x64xf32> to vector<8x32xf32>
    %343 = vector.extract_strided_slice %341 {offsets = [0, 32], sizes = [8, 32], strides = [1, 1]} : vector<8x64xf32> to vector<8x32xf32>
    %344 = vector.extract_strided_slice %330 {offsets = [0, 64], sizes = [8, 32], strides = [1, 1]} : vector<8x128xf32> to vector<8x32xf32>
    %345 = vector.extract_strided_slice %333 {offsets = [0, 64], sizes = [8, 32], strides = [1, 1]} : vector<8x128xf32> to vector<8x32xf32>
    %346 = arith.mulf %342, %345 : vector<8x32xf32>
    %347 = arith.addf %344, %346 : vector<8x32xf32>
    %348 = math.tanh %347 : vector<8x32xf32>
    %cst_105 = arith.constant 1.000000e+00 : f32
    %349 = vector.broadcast %cst_105 : f32 to vector<8x32xf32>
    %350 = arith.subf %349, %343 : vector<8x32xf32>
    %351 = arith.mulf %350, %348 : vector<8x32xf32>
    %352 = arith.mulf %343, %324 : vector<8x32xf32>
    %353 = arith.addf %351, %352 : vector<8x32xf32>
    %354 = arith.index_cast %328 : i32 to index
    %c0_106 = arith.constant 0 : index
    %355 = vector.load %arg8[%354, %c0_106] : memref<64x32xf32, #tpu.memory_space<vmem>>, vector<8x32xf32>
    tpu.vector_store %arg8[%354, %c0_106], %353 {strides = array<i32>} : memref<64x32xf32, #tpu.memory_space<vmem>>, vector<8x32xf32>,
    %c3_i32_107 = arith.constant 3 : i32
    %c8_i32_108 = arith.constant 8 : i32
    %356 = arith.muli %c3_i32_107, %c8_i32_108 : i32
    %357 = tpu.assume_multiple %356, 8 : i32
    %358 = arith.index_cast %357 : i32 to index
    %c0_109 = arith.constant 0 : index
    %359 = vector.load %arg10[%358, %c0_109] : memref<64x128xf32, #tpu.memory_space<vmem>>, vector<8x128xf32>
    %360 = arith.truncf %353 : vector<8x32xf32> to vector<8x32xbf16>
    %cst_110 = arith.constant dense<0.000000e+00> : vector<8x128xf32>
    %361 = tpu.matmul %360, %262, %cst_110 {dimension_numbers = #tpu.dot_dimension_numbers<[1], [0], [0], [1], [0, 0, 1, 1], [], []>} : vector<8x32xbf16>, vector<32x128xbf16>, vector<8x128xf32> -> vector<8x128xf32>
    %362 = arith.addf %361, %266 : vector<8x128xf32>
    %363 = vector.extract_strided_slice %359 {offsets = [0, 0], sizes = [8, 64], strides = [1, 1]} : vector<8x128xf32> to vector<8x64xf32>
    %364 = vector.extract_strided_slice %362 {offsets = [0, 0], sizes = [8, 64], strides = [1, 1]} : vector<8x128xf32> to vector<8x64xf32>
    %365 = arith.addf %363, %364 : vector<8x64xf32>
    %366 = arith.negf %365 : vector<8x64xf32>
    %367 = math.exp %366 : vector<8x64xf32>
    %cst_111 = arith.constant 1.000000e+00 : f32
    %368 = vector.broadcast %cst_111 : f32 to vector<8x64xf32>
    %369 = arith.addf %368, %367 : vector<8x64xf32>
    %370 = arith.divf %368, %369 : vector<8x64xf32>
    %371 = vector.extract_strided_slice %370 {offsets = [0, 0], sizes = [8, 32], strides = [1, 1]} : vector<8x64xf32> to vector<8x32xf32>
    %372 = vector.extract_strided_slice %370 {offsets = [0, 32], sizes = [8, 32], strides = [1, 1]} : vector<8x64xf32> to vector<8x32xf32>
    %373 = vector.extract_strided_slice %359 {offsets = [0, 64], sizes = [8, 32], strides = [1, 1]} : vector<8x128xf32> to vector<8x32xf32>
    %374 = vector.extract_strided_slice %362 {offsets = [0, 64], sizes = [8, 32], strides = [1, 1]} : vector<8x128xf32> to vector<8x32xf32>
    %375 = arith.mulf %371, %374 : vector<8x32xf32>
    %376 = arith.addf %373, %375 : vector<8x32xf32>
    %377 = math.tanh %376 : vector<8x32xf32>
    %cst_112 = arith.constant 1.000000e+00 : f32
    %378 = vector.broadcast %cst_112 : f32 to vector<8x32xf32>
    %379 = arith.subf %378, %372 : vector<8x32xf32>
    %380 = arith.mulf %379, %377 : vector<8x32xf32>
    %381 = arith.mulf %372, %353 : vector<8x32xf32>
    %382 = arith.addf %380, %381 : vector<8x32xf32>
    %383 = arith.index_cast %357 : i32 to index
    %c0_113 = arith.constant 0 : index
    %384 = vector.load %arg8[%383, %c0_113] : memref<64x32xf32, #tpu.memory_space<vmem>>, vector<8x32xf32>
    tpu.vector_store %arg8[%383, %c0_113], %382 {strides = array<i32>} : memref<64x32xf32, #tpu.memory_space<vmem>>, vector<8x32xf32>,
    %c4_i32_114 = arith.constant 4 : i32
    %c8_i32_115 = arith.constant 8 : i32
    %385 = arith.muli %c4_i32_114, %c8_i32_115 : i32
    %386 = tpu.assume_multiple %385, 8 : i32
    %387 = arith.index_cast %386 : i32 to index
    %c0_116 = arith.constant 0 : index
    %388 = vector.load %arg10[%387, %c0_116] : memref<64x128xf32, #tpu.memory_space<vmem>>, vector<8x128xf32>
    %389 = arith.truncf %382 : vector<8x32xf32> to vector<8x32xbf16>
    %cst_117 = arith.constant dense<0.000000e+00> : vector<8x128xf32>
    %390 = tpu.matmul %389, %262, %cst_117 {dimension_numbers = #tpu.dot_dimension_numbers<[1], [0], [0], [1], [0, 0, 1, 1], [], []>} : vector<8x32xbf16>, vector<32x128xbf16>, vector<8x128xf32> -> vector<8x128xf32>
    %391 = arith.addf %390, %266 : vector<8x128xf32>
    %392 = vector.extract_strided_slice %388 {offsets = [0, 0], sizes = [8, 64], strides = [1, 1]} : vector<8x128xf32> to vector<8x64xf32>
    %393 = vector.extract_strided_slice %391 {offsets = [0, 0], sizes = [8, 64], strides = [1, 1]} : vector<8x128xf32> to vector<8x64xf32>
    %394 = arith.addf %392, %393 : vector<8x64xf32>
    %395 = arith.negf %394 : vector<8x64xf32>
    %396 = math.exp %395 : vector<8x64xf32>
    %cst_118 = arith.constant 1.000000e+00 : f32
    %397 = vector.broadcast %cst_118 : f32 to vector<8x64xf32>
    %398 = arith.addf %397, %396 : vector<8x64xf32>
    %399 = arith.divf %397, %398 : vector<8x64xf32>
    %400 = vector.extract_strided_slice %399 {offsets = [0, 0], sizes = [8, 32], strides = [1, 1]} : vector<8x64xf32> to vector<8x32xf32>
    %401 = vector.extract_strided_slice %399 {offsets = [0, 32], sizes = [8, 32], strides = [1, 1]} : vector<8x64xf32> to vector<8x32xf32>
    %402 = vector.extract_strided_slice %388 {offsets = [0, 64], sizes = [8, 32], strides = [1, 1]} : vector<8x128xf32> to vector<8x32xf32>
    %403 = vector.extract_strided_slice %391 {offsets = [0, 64], sizes = [8, 32], strides = [1, 1]} : vector<8x128xf32> to vector<8x32xf32>
    %404 = arith.mulf %400, %403 : vector<8x32xf32>
    %405 = arith.addf %402, %404 : vector<8x32xf32>
    %406 = math.tanh %405 : vector<8x32xf32>
    %cst_119 = arith.constant 1.000000e+00 : f32
    %407 = vector.broadcast %cst_119 : f32 to vector<8x32xf32>
    %408 = arith.subf %407, %401 : vector<8x32xf32>
    %409 = arith.mulf %408, %406 : vector<8x32xf32>
    %410 = arith.mulf %401, %382 : vector<8x32xf32>
    %411 = arith.addf %409, %410 : vector<8x32xf32>
    %412 = arith.index_cast %386 : i32 to index
    %c0_120 = arith.constant 0 : index
    %413 = vector.load %arg8[%412, %c0_120] : memref<64x32xf32, #tpu.memory_space<vmem>>, vector<8x32xf32>
    tpu.vector_store %arg8[%412, %c0_120], %411 {strides = array<i32>} : memref<64x32xf32, #tpu.memory_space<vmem>>, vector<8x32xf32>,
    %c5_i32_121 = arith.constant 5 : i32
    %c8_i32_122 = arith.constant 8 : i32
    %414 = arith.muli %c5_i32_121, %c8_i32_122 : i32
    %415 = tpu.assume_multiple %414, 8 : i32
    %416 = arith.index_cast %415 : i32 to index
    %c0_123 = arith.constant 0 : index
    %417 = vector.load %arg10[%416, %c0_123] : memref<64x128xf32, #tpu.memory_space<vmem>>, vector<8x128xf32>
    %418 = arith.truncf %411 : vector<8x32xf32> to vector<8x32xbf16>
    %cst_124 = arith.constant dense<0.000000e+00> : vector<8x128xf32>
    %419 = tpu.matmul %418, %262, %cst_124 {dimension_numbers = #tpu.dot_dimension_numbers<[1], [0], [0], [1], [0, 0, 1, 1], [], []>} : vector<8x32xbf16>, vector<32x128xbf16>, vector<8x128xf32> -> vector<8x128xf32>
    %420 = arith.addf %419, %266 : vector<8x128xf32>
    %421 = vector.extract_strided_slice %417 {offsets = [0, 0], sizes = [8, 64], strides = [1, 1]} : vector<8x128xf32> to vector<8x64xf32>
    %422 = vector.extract_strided_slice %420 {offsets = [0, 0], sizes = [8, 64], strides = [1, 1]} : vector<8x128xf32> to vector<8x64xf32>
    %423 = arith.addf %421, %422 : vector<8x64xf32>
    %424 = arith.negf %423 : vector<8x64xf32>
    %425 = math.exp %424 : vector<8x64xf32>
    %cst_125 = arith.constant 1.000000e+00 : f32
    %426 = vector.broadcast %cst_125 : f32 to vector<8x64xf32>
    %427 = arith.addf %426, %425 : vector<8x64xf32>
    %428 = arith.divf %426, %427 : vector<8x64xf32>
    %429 = vector.extract_strided_slice %428 {offsets = [0, 0], sizes = [8, 32], strides = [1, 1]} : vector<8x64xf32> to vector<8x32xf32>
    %430 = vector.extract_strided_slice %428 {offsets = [0, 32], sizes = [8, 32], strides = [1, 1]} : vector<8x64xf32> to vector<8x32xf32>
    %431 = vector.extract_strided_slice %417 {offsets = [0, 64], sizes = [8, 32], strides = [1, 1]} : vector<8x128xf32> to vector<8x32xf32>
    %432 = vector.extract_strided_slice %420 {offsets = [0, 64], sizes = [8, 32], strides = [1, 1]} : vector<8x128xf32> to vector<8x32xf32>
    %433 = arith.mulf %429, %432 : vector<8x32xf32>
    %434 = arith.addf %431, %433 : vector<8x32xf32>
    %435 = math.tanh %434 : vector<8x32xf32>
    %cst_126 = arith.constant 1.000000e+00 : f32
    %436 = vector.broadcast %cst_126 : f32 to vector<8x32xf32>
    %437 = arith.subf %436, %430 : vector<8x32xf32>
    %438 = arith.mulf %437, %435 : vector<8x32xf32>
    %439 = arith.mulf %430, %411 : vector<8x32xf32>
    %440 = arith.addf %438, %439 : vector<8x32xf32>
    %441 = arith.index_cast %415 : i32 to index
    %c0_127 = arith.constant 0 : index
    %442 = vector.load %arg8[%441, %c0_127] : memref<64x32xf32, #tpu.memory_space<vmem>>, vector<8x32xf32>
    tpu.vector_store %arg8[%441, %c0_127], %440 {strides = array<i32>} : memref<64x32xf32, #tpu.memory_space<vmem>>, vector<8x32xf32>,
    %c6_i32_128 = arith.constant 6 : i32
    %c8_i32_129 = arith.constant 8 : i32
    %443 = arith.muli %c6_i32_128, %c8_i32_129 : i32
    %444 = tpu.assume_multiple %443, 8 : i32
    %445 = arith.index_cast %444 : i32 to index
    %c0_130 = arith.constant 0 : index
    %446 = vector.load %arg10[%445, %c0_130] : memref<64x128xf32, #tpu.memory_space<vmem>>, vector<8x128xf32>
    %447 = arith.truncf %440 : vector<8x32xf32> to vector<8x32xbf16>
    %cst_131 = arith.constant dense<0.000000e+00> : vector<8x128xf32>
    %448 = tpu.matmul %447, %262, %cst_131 {dimension_numbers = #tpu.dot_dimension_numbers<[1], [0], [0], [1], [0, 0, 1, 1], [], []>} : vector<8x32xbf16>, vector<32x128xbf16>, vector<8x128xf32> -> vector<8x128xf32>
    %449 = arith.addf %448, %266 : vector<8x128xf32>
    %450 = vector.extract_strided_slice %446 {offsets = [0, 0], sizes = [8, 64], strides = [1, 1]} : vector<8x128xf32> to vector<8x64xf32>
    %451 = vector.extract_strided_slice %449 {offsets = [0, 0], sizes = [8, 64], strides = [1, 1]} : vector<8x128xf32> to vector<8x64xf32>
    %452 = arith.addf %450, %451 : vector<8x64xf32>
    %453 = arith.negf %452 : vector<8x64xf32>
    %454 = math.exp %453 : vector<8x64xf32>
    %cst_132 = arith.constant 1.000000e+00 : f32
    %455 = vector.broadcast %cst_132 : f32 to vector<8x64xf32>
    %456 = arith.addf %455, %454 : vector<8x64xf32>
    %457 = arith.divf %455, %456 : vector<8x64xf32>
    %458 = vector.extract_strided_slice %457 {offsets = [0, 0], sizes = [8, 32], strides = [1, 1]} : vector<8x64xf32> to vector<8x32xf32>
    %459 = vector.extract_strided_slice %457 {offsets = [0, 32], sizes = [8, 32], strides = [1, 1]} : vector<8x64xf32> to vector<8x32xf32>
    %460 = vector.extract_strided_slice %446 {offsets = [0, 64], sizes = [8, 32], strides = [1, 1]} : vector<8x128xf32> to vector<8x32xf32>
    %461 = vector.extract_strided_slice %449 {offsets = [0, 64], sizes = [8, 32], strides = [1, 1]} : vector<8x128xf32> to vector<8x32xf32>
    %462 = arith.mulf %458, %461 : vector<8x32xf32>
    %463 = arith.addf %460, %462 : vector<8x32xf32>
    %464 = math.tanh %463 : vector<8x32xf32>
    %cst_133 = arith.constant 1.000000e+00 : f32
    %465 = vector.broadcast %cst_133 : f32 to vector<8x32xf32>
    %466 = arith.subf %465, %459 : vector<8x32xf32>
    %467 = arith.mulf %466, %464 : vector<8x32xf32>
    %468 = arith.mulf %459, %440 : vector<8x32xf32>
    %469 = arith.addf %467, %468 : vector<8x32xf32>
    %470 = arith.index_cast %444 : i32 to index
    %c0_134 = arith.constant 0 : index
    %471 = vector.load %arg8[%470, %c0_134] : memref<64x32xf32, #tpu.memory_space<vmem>>, vector<8x32xf32>
    tpu.vector_store %arg8[%470, %c0_134], %469 {strides = array<i32>} : memref<64x32xf32, #tpu.memory_space<vmem>>, vector<8x32xf32>,
    %c7_i32_135 = arith.constant 7 : i32
    %c8_i32_136 = arith.constant 8 : i32
    %472 = arith.muli %c7_i32_135, %c8_i32_136 : i32
    %473 = tpu.assume_multiple %472, 8 : i32
    %474 = arith.index_cast %473 : i32 to index
    %c0_137 = arith.constant 0 : index
    %475 = vector.load %arg10[%474, %c0_137] : memref<64x128xf32, #tpu.memory_space<vmem>>, vector<8x128xf32>
    %476 = arith.truncf %469 : vector<8x32xf32> to vector<8x32xbf16>
    %cst_138 = arith.constant dense<0.000000e+00> : vector<8x128xf32>
    %477 = tpu.matmul %476, %262, %cst_138 {dimension_numbers = #tpu.dot_dimension_numbers<[1], [0], [0], [1], [0, 0, 1, 1], [], []>} : vector<8x32xbf16>, vector<32x128xbf16>, vector<8x128xf32> -> vector<8x128xf32>
    %478 = arith.addf %477, %266 : vector<8x128xf32>
    %479 = vector.extract_strided_slice %475 {offsets = [0, 0], sizes = [8, 64], strides = [1, 1]} : vector<8x128xf32> to vector<8x64xf32>
    %480 = vector.extract_strided_slice %478 {offsets = [0, 0], sizes = [8, 64], strides = [1, 1]} : vector<8x128xf32> to vector<8x64xf32>
    %481 = arith.addf %479, %480 : vector<8x64xf32>
    %482 = arith.negf %481 : vector<8x64xf32>
    %483 = math.exp %482 : vector<8x64xf32>
    %cst_139 = arith.constant 1.000000e+00 : f32
    %484 = vector.broadcast %cst_139 : f32 to vector<8x64xf32>
    %485 = arith.addf %484, %483 : vector<8x64xf32>
    %486 = arith.divf %484, %485 : vector<8x64xf32>
    %487 = vector.extract_strided_slice %486 {offsets = [0, 0], sizes = [8, 32], strides = [1, 1]} : vector<8x64xf32> to vector<8x32xf32>
    %488 = vector.extract_strided_slice %486 {offsets = [0, 32], sizes = [8, 32], strides = [1, 1]} : vector<8x64xf32> to vector<8x32xf32>
    %489 = vector.extract_strided_slice %475 {offsets = [0, 64], sizes = [8, 32], strides = [1, 1]} : vector<8x128xf32> to vector<8x32xf32>
    %490 = vector.extract_strided_slice %478 {offsets = [0, 64], sizes = [8, 32], strides = [1, 1]} : vector<8x128xf32> to vector<8x32xf32>
    %491 = arith.mulf %487, %490 : vector<8x32xf32>
    %492 = arith.addf %489, %491 : vector<8x32xf32>
    %493 = math.tanh %492 : vector<8x32xf32>
    %cst_140 = arith.constant 1.000000e+00 : f32
    %494 = vector.broadcast %cst_140 : f32 to vector<8x32xf32>
    %495 = arith.subf %494, %488 : vector<8x32xf32>
    %496 = arith.mulf %495, %493 : vector<8x32xf32>
    %497 = arith.mulf %488, %469 : vector<8x32xf32>
    %498 = arith.addf %496, %497 : vector<8x32xf32>
    %499 = arith.index_cast %473 : i32 to index
    %c0_141 = arith.constant 0 : index
    %500 = vector.load %arg8[%499, %c0_141] : memref<64x32xf32, #tpu.memory_space<vmem>>, vector<8x32xf32>
    tpu.vector_store %arg8[%499, %c0_141], %498 {strides = array<i32>} : memref<64x32xf32, #tpu.memory_space<vmem>>, vector<8x32xf32>,
    %c8_i32_142 = arith.constant 8 : i32
    %c1_143 = arith.constant 1 : index
    %c0_144 = arith.constant 0 : index
    %c0_145 = arith.constant 0 : index
    %501 = vector.load %arg9[%c1_143, %c0_144, %c0_145] : memref<2x8x32xf32, #tpu.memory_space<vmem>>, vector<1x8x32xf32>
    %502 = vector.shape_cast %501 : vector<1x8x32xf32> to vector<8x32xf32>
    %503 = vector.shape_cast %498 : vector<8x32xf32> to vector<1x8x32xf32>
    tpu.vector_store %arg9[%c1_143, %c0_144, %c0_145], %503 {strides = array<i32>} : memref<2x8x32xf32, #tpu.memory_space<vmem>>, vector<1x8x32xf32>,
    return
  }
}

</mosaic_0001>

<llo_original>
// kernel: tpu_custom_call.1
$region0: #{tpu_custom_call.1}
  #allocation0 [shape = 'u32[]', space=smem, size = 0x4, offset = 0x4, fixed_abs, tag = 'smem constant byte address 0x4 - core index']
  #allocation1 [shape = 'u32[144,128]{1,0:T(1,128)}', space=vmem, size = 0x12000, scoped, tag = 'internal scratch']
  #allocation2 [shape = 'f32[64,128]{1,0:T(8,128)}', space=vmem, size = 0x8000, scoped, tag = 'scratch operand']
  %s0 = inlined_call_operand.vmem [shape: f32[64,16], index: 0, kind: input, shape index: {}]
  %s1 = inlined_call_operand.vmem [shape: bf16[16,128], index: 1, kind: input, shape index: {}]
  %s2 = inlined_call_operand.vmem [shape: f32[1,128], index: 2, kind: input, shape index: {}]
  %s3 = inlined_call_operand.vmem [shape: bf16[1,32,128], index: 3, kind: input, shape index: {}]
  %s4 = inlined_call_operand.vmem [shape: f32[1,1,128], index: 4, kind: input, shape index: {}]
  %s5 = inlined_call_operand.vmem [shape: bf16[2,32,128], index: 5, kind: input, shape index: {}]
  %s6 = inlined_call_operand.vmem [shape: f32[2,1,128], index: 6, kind: input, shape index: {}]
  %s7 = inlined_call_operand.vmem [shape: f32[2,8,32], index: 7, kind: input, shape index: {}]
  %s8 = inlined_call_operand.vmem [shape: f32[64,32], index: 8, kind: output, shape index: {0}]
  %s9 = inlined_call_operand.hbm [shape: f32[2,8,32], index: 9, kind: output, shape index: {1}]
  %10 = xla_tuple %s8, %s9
  %s11 = sld [smem:[#allocation0]]
  $region50: #{tpu_custom_call.1} parent=0
    _
  %s13 = ssub.s32 1, %s11
  %s14 = scalar_select 0, %s13, %s11
  $region1: #{tpu_custom_call.1} parent=0
    #allocation3 [shape = 'u8[8192]{0}', space=vmem, size = 0x2000, scoped, tag = 'output window, operand 1, single buffered']
    #allocation4 [shape = 's32[1]{0}', space=sflag, size = 0x4, scoped, tag = 'scoped memory for tpu_custom_call.1']
    %15 = vsyncpa [#allocation4], 0
    // Predicated region
    $region2: #{tpu_custom_call.1} parent=1 // pred_check
      _
    $region3: #{tpu_custom_call.1} parent=1 // pred_check_branch
      %17 = sbr.rel (0) target = $region5
    $region4: #{tpu_custom_call.1} parent=1 // pred_region
      _
    $region5: #{tpu_custom_call.1} parent=1 // pred_fallthru
      _
    // Predicated region
    $region6: #{tpu_custom_call.1} parent=1 // pred_check
      _
    $region7: #{tpu_custom_call.1} parent=1 // pred_check_branch
      %19 = sbr.rel (0) target = $region9
    $region8: #{tpu_custom_call.1} parent=1 // pred_region
      _
    $region9: #{tpu_custom_call.1} parent=1 // pred_fallthru
      _
    // Predicated region
    $region10: #{tpu_custom_call.1} parent=1 // pred_check
      _
    $region11: #{tpu_custom_call.1} parent=1 // pred_check_branch
      %21 = sbr.rel (0) target = $region13
    $region12: #{tpu_custom_call.1} parent=1 // pred_region
      _
    $region13: #{tpu_custom_call.1} parent=1 // pred_fallthru
      _
    // Predicated region
    $region14: #{tpu_custom_call.1} parent=1 // pred_check
      _
    $region15: #{tpu_custom_call.1} parent=1 // pred_check_branch
      %23 = sbr.rel (0) target = $region17
    $region16: #{tpu_custom_call.1} parent=1 // pred_region
      _
    $region17: #{tpu_custom_call.1} parent=1 // pred_fallthru
      _
    // Predicated region
    $region18: #{tpu_custom_call.1} parent=1 // pred_check
      _
    $region19: #{tpu_custom_call.1} parent=1 // pred_check_branch
      %25 = sbr.rel (0) target = $region21
    $region20: #{tpu_custom_call.1} parent=1 // pred_region
      _
    $region21: #{tpu_custom_call.1} parent=1 // pred_fallthru
      _
    // Predicated region
    $region22: #{tpu_custom_call.1} parent=1 // pred_check
      _
    $region23: #{tpu_custom_call.1} parent=1 // pred_check_branch
      %27 = sbr.rel (0) target = $region25
    $region24: #{tpu_custom_call.1} parent=1 // pred_region
      _
    $region25: #{tpu_custom_call.1} parent=1 // pred_fallthru
      _
    // Predicated region
    $region26: #{tpu_custom_call.1} parent=1 // pred_check
      _
    $region27: #{tpu_custom_call.1} parent=1 // pred_check_branch
      %29 = sbr.rel (0) target = $region29
    $region28: #{tpu_custom_call.1} parent=1 // pred_region
      _
    $region29: #{tpu_custom_call.1} parent=1 // pred_fallthru
      _
    // Predicated region
    $region30: #{tpu_custom_call.1} parent=1 // pred_check
      _
    $region31: #{tpu_custom_call.1} parent=1 // pred_check_branch
      %31 = sbr.rel (0) target = $region33
    $region32: #{tpu_custom_call.1} parent=1 // pred_region
      _
    $region33: #{tpu_custom_call.1} parent=1 // pred_fallthru
      _
    %v33 = vld [vmem:[%s0] sm:$0xff]
    %v34 = vld [vmem:[%s0 + $0x8] sm:$0xff]
    %v35 = vld [vmem:[%s0 + $0x10] sm:$0xff]
    %v36 = vld [vmem:[%s0 + $0x18] sm:$0xff]
    %v37 = vld [vmem:[%s0 + $0x20] sm:$0xff]
    %v38 = vld [vmem:[%s0 + $0x28] sm:$0xff]
    %v39 = vld [vmem:[%s0 + $0x30] sm:$0xff]
    %v40 = vld [vmem:[%s0 + $0x38] sm:$0xff]
    %v41 = vld [vmem:[%s1] sm:$0xf]
    %v42 = vld [vmem:[%s1 + $0x4] sm:$0xf]
    %v43 = vld [vmem:[%s2] sm:$0x1]
    %v44 = vpack.c.bf16 %v34, %v33
    %v45 = vpack.c.bf16 %v36, %v35
    %v46 = vpack.c.bf16 %v38, %v37
    %v47 = vpack.c.bf16 %v40, %v39
    %v49 = vlaneseq
    %v50 = vshrl.u32 %v49, 7
    %v51 = vsub.s32 0, %v50
    %v52 = vrot.slane %v43, %v51
    %v56 = vunpack.c.l.b16 %v41
    %v57 = vunpack.c.l.b16 %v42
    %v58 = vpack.c.b16 %v57, %v56
    %vm60 = vcmask 130048
    %v62 = vsel %vm60, %v44, 0
    %v65 = vsel %vm60, %v45, 0
    %v68 = vsel %vm60, %v46, 0
    %v71 = vsel %vm60, %v47, 0
    %73 = vmatprep.subr.bf16.mxu0 0
    %74 = vmatpush1.bf16.msra.mxu0 0
    %75 = vmatprep.subr.bf16.mxu0 0
    %76 = vmatpush1.bf16.msra.mxu0 0
    %77 = vmatprep.subr.bf16.mxu0 0
    %78 = vmatpush1.bf16.msra.mxu0 0
    %79 = vmatprep.subr.bf16.mxu0 0
    %80 = vmatpush1.bf16.msra.mxu0 0
    %81 = vmatprep.subr.bf16.mxu0 0
    %82 = vmatpush1.bf16.msra.mxu0 0
    %83 = vmatprep.subr.bf16.mxu0 0
    %84 = vmatpush1.bf16.msra.mxu0 0
    %85 = vmatprep.subr.bf16.mxu0 0
    %86 = vmatpush1.bf16.msra.mxu0 0
    %87 = vmatprep.subr.bf16.mxu0 0
    %88 = vmatpush1.bf16.msra.mxu0 %v58
    %89 = vmatprep.subr.bf16.mxu0 0
    %90 = vmatpush2.bf16.msra.mxu0 0
    %91 = vmatprep.subr.bf16.mxu0 0
    %92 = vmatpush2.bf16.msra.mxu0 0
    %93 = vmatprep.subr.bf16.mxu0 0
    %94 = vmatpush2.bf16.msra.mxu0 0
    %95 = vmatprep.subr.bf16.mxu0 0
    %96 = vmatpush2.bf16.msra.mxu0 0
    %97 = vmatprep.subr.bf16.mxu0 0
    %98 = vmatpush2.bf16.msra.mxu0 0
    %99 = vmatprep.subr.bf16.mxu0 0
    %100 = vmatpush2.bf16.msra.mxu0 0
    %101 = vmatprep.subr.bf16.mxu0 0
    %102 = vmatpush2.bf16.msra.mxu0 0
    %103 = vmatprep.subr.bf16.mxu0 0
    %104 = vmatpush2.bf16.msra.mxu0 0
    %105 = vmatprep.mubr.bf16.mxu0 0
    %106 = vmatmul.mubr.bf16.gmra.mxu0 %v62
    %v107 = vpop.f32.mrf.mxu0
    %v108 = vadd.f32 %v52, %v107
    %v109 = vpop.f32.mrf.mxu0
    %v110 = vpop.f32.mrf.mxu0
    %v111 = vadd.f32 %v52, %v110
    %v112 = vpop.f32.mrf.mxu0
    %113 = vmatprep.mubr.bf16.mxu0 0
    %114 = vmatmul.mubr.bf16.gmra.mxu0 %v65
    %v115 = vpop.f32.mrf.mxu0
    %v116 = vadd.f32 %v52, %v115
    %v117 = vpop.f32.mrf.mxu0
    %v118 = vpop.f32.mrf.mxu0
    %v119 = vadd.f32 %v52, %v118
    %v120 = vpop.f32.mrf.mxu0
    %121 = vmatprep.mubr.bf16.mxu0 0
    %122 = vmatmul.mubr.bf16.gmra.mxu0 %v68
    %v123 = vpop.f32.mrf.mxu0
    %v124 = vadd.f32 %v52, %v123
    %v125 = vpop.f32.mrf.mxu0
    %v126 = vpop.f32.mrf.mxu0
    %v127 = vadd.f32 %v52, %v126
    %v128 = vpop.f32.mrf.mxu0
    %129 = vmatprep.mubr.bf16.mxu0 0
    %130 = vmatmul.mubr.bf16.gmra.mxu0 %v71
    %v131 = vpop.f32.mrf.mxu0
    %v132 = vadd.f32 %v52, %v131
    %v133 = vpop.f32.mrf.mxu0
    %v134 = vpop.f32.mrf.mxu0
    %v135 = vadd.f32 %v52, %v134
    %v136 = vpop.f32.mrf.mxu0
    %137 = vdwg.mxu0
    %138 = vst [vmem:[#allocation2] sm:$0xff] %v108
    %139 = vst [vmem:[#allocation2 + $0x8] sm:$0xff] %v111
    %140 = vst [vmem:[#allocation2 + $0x10] sm:$0xff] %v116
    %141 = vst [vmem:[#allocation2 + $0x18] sm:$0xff] %v119
    %142 = vst [vmem:[#allocation2 + $0x20] sm:$0xff] %v124
    %143 = vst [vmem:[#allocation2 + $0x28] sm:$0xff] %v127
    %144 = vst [vmem:[#allocation2 + $0x30] sm:$0xff] %v132
    %145 = vst [vmem:[#allocation2 + $0x38] sm:$0xff] %v135
    %v146 = vld [vmem:[%s5] sm:$0xf]
    %v147 = vld [vmem:[%s5 + $0x4] sm:$0xf]
    %v148 = vld [vmem:[%s5 + $0x8] sm:$0xf]
    %v149 = vld [vmem:[%s5 + $0xc] sm:$0xf]
    %v150 = vld [vmem:[%s6] sm:$0x1]
    %v152 = vlaneseq
    %v153 = vshrl.u32 %v152, 7
    %v154 = vsub.s32 0, %v153
    %v155 = vrot.slane %v150, %v154
    %v157 = vld [vmem:[%s7] sm:$0xff]
    %v158 = vld [vmem:[#allocation2] sm:$0xff]
    %v159 = vpack.c.bf16 %v157, %v157
    %v164 = vunpack.c.l.b16 %v146
    %v165 = vunpack.c.l.b16 %v147
    %v166 = vunpack.c.l.b16 %v148
    %v167 = vunpack.c.l.b16 %v149
    %v168 = vpack.c.b16 %v165, %v164
    %v169 = vpack.c.b16 %v167, %v166
    %vm172 = vcmask 261120
    %v174 = vsel %vm172, %v159, 0
    %176 = vmatprep.subr.bf16.mxu0 0
    %177 = vmatpush1.bf16.msra.mxu0 0
    %178 = vmatprep.subr.bf16.mxu0 0
    %179 = vmatpush1.bf16.msra.mxu0 0
    %180 = vmatprep.subr.bf16.mxu0 0
    %181 = vmatpush1.bf16.msra.mxu0 0
    %182 = vmatprep.subr.bf16.mxu0 0
    %183 = vmatpush1.bf16.msra.mxu0 0
    %184 = vmatprep.subr.bf16.mxu0 0
    %185 = vmatpush1.bf16.msra.mxu0 0
    %186 = vmatprep.subr.bf16.mxu0 0
    %187 = vmatpush1.bf16.msra.mxu0 0
    %188 = vmatprep.subr.bf16.mxu0 0
    %189 = vmatpush1.bf16.msra.mxu0 %v169
    %190 = vmatprep.subr.bf16.mxu0 0
    %191 = vmatpush1.bf16.msra.mxu0 %v168
    %192 = vmatprep.subr.bf16.mxu0 0
    %193 = vmatpush2.bf16.msra.mxu0 0
    %194 = vmatprep.subr.bf16.mxu0 0
    %195 = vmatpush2.bf16.msra.mxu0 0
    %196 = vmatprep.subr.bf16.mxu0 0
    %197 = vmatpush2.bf16.msra.mxu0 0
    %198 = vmatprep.subr.bf16.mxu0 0
    %199 = vmatpush2.bf16.msra.mxu0 0
    %200 = vmatprep.subr.bf16.mxu0 0
    %201 = vmatpush2.bf16.msra.mxu0 0
    %202 = vmatprep.subr.bf16.mxu0 0
    %203 = vmatpush2.bf16.msra.mxu0 0
    %204 = vmatprep.subr.bf16.mxu0 0
    %205 = vmatpush2.bf16.msra.mxu0 0
    %206 = vmatprep.subr.bf16.mxu0 0
    %207 = vmatpush2.bf16.msra.mxu0 0
    %208 = vmatprep.mubr.bf16.mxu0 0
    %209 = vmatmul.mubr.bf16.gmra.mxu0 %v174
    %v210 = vpop.f32.mrf.mxu0
    %v211 = vadd.f32 %v155, %v210
    %v212 = vpop.f32.mrf.mxu0
    %v213 = vpop.f32.mrf.mxu0
    %v214 = vpop.f32.mrf.mxu0
    %215 = vdwg.mxu0
    %v216 = vadd.f32 %v158, %v211
    %v217 = vxor.u32 %v216, 2147483648
    %v218 = vmul.f32 %v217, 1.442695
    %v219 = vpow.pop %v218
    %v220 = vadd.f32 %v219, 1.0
    %v221 = vrcp.pop %v220
    %v222 = vmul.f32 1.0, %v221
    %224 = vrot.lane.b32.xlu0 %v211, 64
    %v225 = vpop.permute.xlu0 %224
    %v227 = vmul.f32 %v222, %v225
    %229 = vrot.lane.b32.xlu0 %v227, 64
    %v230 = vpop.permute.xlu0 %229
    %v232 = vadd.f32 %v158, %v230
    %v233 = vtanh.pop %v232
    %v234 = vsub.f32 1.0, %v222
    %236 = vrot.lane.b32.xlu0 %v233, 96
    %v237 = vpop.permute.xlu0 %236
    %v239 = vmul.f32 %v234, %v237
    %241 = vrot.lane.b32.xlu0 %v157, 32
    %v242 = vpop.permute.xlu0 %241
    %v244 = vmul.f32 %v222, %v242
    %v245 = vadd.f32 %v239, %v244
    %247 = vrot.lane.b32.xlu0 %v245, 96
    %v248 = vpop.permute.xlu0 %247
    %250 = vst.msk [vmem:[%s8] sm:$0xff] %vm172, %v248
    %s251 = scalar_lea.vmem [#allocation2], 8
    %v252 = vld [vmem:[%s251] sm:$0xff]
    %v253 = vpack.c.bf16 %v245, %v245
    %255 = vrot.lane.b32.xlu0 %v253, 96
    %v256 = vpop.permute.xlu0 %255
    %v258 = vsel %vm172, %v256, 0
    %260 = vmatprep.subr.bf16.mxu0 0
    %261 = vmatpush1.bf16.msra.mxu0 0
    %262 = vmatprep.subr.bf16.mxu0 0
    %263 = vmatpush1.bf16.msra.mxu0 0
    %264 = vmatprep.subr.bf16.mxu0 0
    %265 = vmatpush1.bf16.msra.mxu0 0
    %266 = vmatprep.subr.bf16.mxu0 0
    %267 = vmatpush1.bf16.msra.mxu0 0
    %268 = vmatprep.subr.bf16.mxu0 0
    %269 = vmatpush1.bf16.msra.mxu0 0
    %270 = vmatprep.subr.bf16.mxu0 0
    %271 = vmatpush1.bf16.msra.mxu0 0
    %272 = vmatprep.subr.bf16.mxu0 0
    %273 = vmatpush1.bf16.msra.mxu0 %v169
    %274 = vmatprep.subr.bf16.mxu0 0
    %275 = vmatpush1.bf16.msra.mxu0 %v168
    %276 = vmatprep.subr.bf16.mxu0 0
    %277 = vmatpush2.bf16.msra.mxu0 0
    %278 = vmatprep.subr.bf16.mxu0 0
    %279 = vmatpush2.bf16.msra.mxu0 0
    %280 = vmatprep.subr.bf16.mxu0 0
    %281 = vmatpush2.bf16.msra.mxu0 0
    %282 = vmatprep.subr.bf16.mxu0 0
    %283 = vmatpush2.bf16.msra.mxu0 0
    %284 = vmatprep.subr.bf16.mxu0 0
    %285 = vmatpush2.bf16.msra.mxu0 0
    %286 = vmatprep.subr.bf16.mxu0 0
    %287 = vmatpush2.bf16.msra.mxu0 0
    %288 = vmatprep.subr.bf16.mxu0 0
    %289 = vmatpush2.bf16.msra.mxu0 0
    %290 = vmatprep.subr.bf16.mxu0 0
    %291 = vmatpush2.bf16.msra.mxu0 0
    %292 = vmatprep.mubr.bf16.mxu0 0
    %293 = vmatmul.mubr.bf16.gmra.mxu0 %v258
    %v294 = vpop.f32.mrf.mxu0
    %v295 = vadd.f32 %v155, %v294
    %v296 = vpop.f32.mrf.mxu0
    %v297 = vpop.f32.mrf.mxu0
    %v298 = vpop.f32.mrf.mxu0
    %299 = vdwg.mxu0
    %v300 = vadd.f32 %v252, %v295
    %v301 = vxor.u32 %v300, 2147483648
    %v302 = vmul.f32 %v301, 1.442695
    %v303 = vpow.pop %v302
    %v304 = vadd.f32 %v303, 1.0
    %v305 = vrcp.pop %v304
    %v306 = vmul.f32 1.0, %v305
    %308 = vrot.lane.b32.xlu0 %v295, 64
    %v309 = vpop.permute.xlu0 %308
    %v311 = vmul.f32 %v306, %v309
    %313 = vrot.lane.b32.xlu0 %v311, 64
    %v314 = vpop.permute.xlu0 %313
    %v316 = vadd.f32 %v252, %v314
    %v317 = vtanh.pop %v316
    %v318 = vsub.f32 1.0, %v306
    %320 = vrot.lane.b32.xlu0 %v317, 96
    %v321 = vpop.permute.xlu0 %320
    %v323 = vmul.f32 %v318, %v321
    %v324 = vmul.f32 %v306, %v245
    %v325 = vadd.f32 %v323, %v324
    %327 = vrot.lane.b32.xlu0 %v325, 96
    %v328 = vpop.permute.xlu0 %327
    %s330 = scalar_lea.vmem %s8, 8
    %331 = vst.msk [vmem:[%s330] sm:$0xff] %vm172, %v328
    %s332 = scalar_lea.vmem [#allocation2], 16
    %v333 = vld [vmem:[%s332] sm:$0xff]
    %v334 = vpack.c.bf16 %v325, %v325
    %336 = vrot.lane.b32.xlu0 %v334, 96
    %v337 = vpop.permute.xlu0 %336
    %v339 = vsel %vm172, %v337, 0
    %341 = vmatprep.subr.bf16.mxu0 0
    %342 = vmatpush1.bf16.msra.mxu0 0
    %343 = vmatprep.subr.bf16.mxu0 0
    %344 = vmatpush1.bf16.msra.mxu0 0
    %345 = vmatprep.subr.bf16.mxu0 0
    %346 = vmatpush1.bf16.msra.mxu0 0
    %347 = vmatprep.subr.bf16.mxu0 0
    %348 = vmatpush1.bf16.msra.mxu0 0
    %349 = vmatprep.subr.bf16.mxu0 0
    %350 = vmatpush1.bf16.msra.mxu0 0
    %351 = vmatprep.subr.bf16.mxu0 0
    %352 = vmatpush1.bf16.msra.mxu0 0
    %353 = vmatprep.subr.bf16.mxu0 0
    %354 = vmatpush1.bf16.msra.mxu0 %v169
    %355 = vmatprep.subr.bf16.mxu0 0
    %356 = vmatpush1.bf16.msra.mxu0 %v168
    %357 = vmatprep.subr.bf16.mxu0 0
    %358 = vmatpush2.bf16.msra.mxu0 0
    %359 = vmatprep.subr.bf16.mxu0 0
    %360 = vmatpush2.bf16.msra.mxu0 0
    %361 = vmatprep.subr.bf16.mxu0 0
    %362 = vmatpush2.bf16.msra.mxu0 0
    %363 = vmatprep.subr.bf16.mxu0 0
    %364 = vmatpush2.bf16.msra.mxu0 0
    %365 = vmatprep.subr.bf16.mxu0 0
    %366 = vmatpush2.bf16.msra.mxu0 0
    %367 = vmatprep.subr.bf16.mxu0 0
    %368 = vmatpush2.bf16.msra.mxu0 0
    %369 = vmatprep.subr.bf16.mxu0 0
    %370 = vmatpush2.bf16.msra.mxu0 0
    %371 = vmatprep.subr.bf16.mxu0 0
    %372 = vmatpush2.bf16.msra.mxu0 0
    %373 = vmatprep.mubr.bf16.mxu0 0
    %374 = vmatmul.mubr.bf16.gmra.mxu0 %v339
    %v375 = vpop.f32.mrf.mxu0
    %v376 = vadd.f32 %v155, %v375
    %v377 = vpop.f32.mrf.mxu0
    %v378 = vpop.f32.mrf.mxu0
    %v379 = vpop.f32.mrf.mxu0
    %380 = vdwg.mxu0
    %v381 = vadd.f32 %v333, %v376
    %v382 = vxor.u32 %v381, 2147483648
    %v383 = vmul.f32 %v382, 1.442695
    %v384 = vpow.pop %v383
    %v385 = vadd.f32 %v384, 1.0
    %v386 = vrcp.pop %v385
    %v387 = vmul.f32 1.0, %v386
    %389 = vrot.lane.b32.xlu0 %v376, 64
    %v390 = vpop.permute.xlu0 %389
    %v392 = vmul.f32 %v387, %v390
    %394 = vrot.lane.b32.xlu0 %v392, 64
    %v395 = vpop.permute.xlu0 %394
    %v397 = vadd.f32 %v333, %v395
    %v398 = vtanh.pop %v397
    %v399 = vsub.f32 1.0, %v387
    %401 = vrot.lane.b32.xlu0 %v398, 96
    %v402 = vpop.permute.xlu0 %401
    %v404 = vmul.f32 %v399, %v402
    %v405 = vmul.f32 %v387, %v325
    %v406 = vadd.f32 %v404, %v405
    %408 = vrot.lane.b32.xlu0 %v406, 96
    %v409 = vpop.permute.xlu0 %408
    %s411 = scalar_lea.vmem %s8, 16
    %412 = vst.msk [vmem:[%s411] sm:$0xff] %vm172, %v409
    %s413 = scalar_lea.vmem [#allocation2], 24
    %v414 = vld [vmem:[%s413] sm:$0xff]
    %v415 = vpack.c.bf16 %v406, %v406
    %417 = vrot.lane.b32.xlu0 %v415, 96
    %v418 = vpop.permute.xlu0 %417
    %v420 = vsel %vm172, %v418, 0
    %422 = vmatprep.subr.bf16.mxu0 0
    %423 = vmatpush1.bf16.msra.mxu0 0
    %424 = vmatprep.subr.bf16.mxu0 0
    %425 = vmatpush1.bf16.msra.mxu0 0
    %426 = vmatprep.subr.bf16.mxu0 0
    %427 = vmatpush1.bf16.msra.mxu0 0
    %428 = vmatprep.subr.bf16.mxu0 0
    %429 = vmatpush1.bf16.msra.mxu0 0
    %430 = vmatprep.subr.bf16.mxu0 0
    %431 = vmatpush1.bf16.msra.mxu0 0
    %432 = vmatprep.subr.bf16.mxu0 0
    %433 = vmatpush1.bf16.msra.mxu0 0
    %434 = vmatprep.subr.bf16.mxu0 0
    %435 = vmatpush1.bf16.msra.mxu0 %v169
    %436 = vmatprep.subr.bf16.mxu0 0
    %437 = vmatpush1.bf16.msra.mxu0 %v168
    %438 = vmatprep.subr.bf16.mxu0 0
    %439 = vmatpush2.bf16.msra.mxu0 0
    %440 = vmatprep.subr.bf16.mxu0 0
    %441 = vmatpush2.bf16.msra.mxu0 0
    %442 = vmatprep.subr.bf16.mxu0 0
    %443 = vmatpush2.bf16.msra.mxu0 0
    %444 = vmatprep.subr.bf16.mxu0 0
    %445 = vmatpush2.bf16.msra.mxu0 0
    %446 = vmatprep.subr.bf16.mxu0 0
    %447 = vmatpush2.bf16.msra.mxu0 0
    %448 = vmatprep.subr.bf16.mxu0 0
    %449 = vmatpush2.bf16.msra.mxu0 0
    %450 = vmatprep.subr.bf16.mxu0 0
    %451 = vmatpush2.bf16.msra.mxu0 0
    %452 = vmatprep.subr.bf16.mxu0 0
    %453 = vmatpush2.bf16.msra.mxu0 0
    %454 = vmatprep.mubr.bf16.mxu0 0
    %455 = vmatmul.mubr.bf16.gmra.mxu0 %v420
    %v456 = vpop.f32.mrf.mxu0
    %v457 = vadd.f32 %v155, %v456
    %v458 = vpop.f32.mrf.mxu0
    %v459 = vpop.f32.mrf.mxu0
    %v460 = vpop.f32.mrf.mxu0
    %461 = vdwg.mxu0
    %v462 = vadd.f32 %v414, %v457
    %v463 = vxor.u32 %v462, 2147483648
    %v464 = vmul.f32 %v463, 1.442695
    %v465 = vpow.pop %v464
    %v466 = vadd.f32 %v465, 1.0
    %v467 = vrcp.pop %v466
    %v468 = vmul.f32 1.0, %v467
    %470 = vrot.lane.b32.xlu0 %v457, 64
    %v471 = vpop.permute.xlu0 %470
    %v473 = vmul.f32 %v468, %v471
    %475 = vrot.lane.b32.xlu0 %v473, 64
    %v476 = vpop.permute.xlu0 %475
    %v478 = vadd.f32 %v414, %v476
    %v479 = vtanh.pop %v478
    %v480 = vsub.f32 1.0, %v468
    %482 = vrot.lane.b32.xlu0 %v479, 96
    %v483 = vpop.permute.xlu0 %482
    %v485 = vmul.f32 %v480, %v483
    %v486 = vmul.f32 %v468, %v406
    %v487 = vadd.f32 %v485, %v486
    %489 = vrot.lane.b32.xlu0 %v487, 96
    %v490 = vpop.permute.xlu0 %489
    %s492 = scalar_lea.vmem %s8, 24
    %493 = vst.msk [vmem:[%s492] sm:$0xff] %vm172, %v490
    %s494 = scalar_lea.vmem [#allocation2], 32
    %v495 = vld [vmem:[%s494] sm:$0xff]
    %v496 = vpack.c.bf16 %v487, %v487
    %498 = vrot.lane.b32.xlu0 %v496, 96
    %v499 = vpop.permute.xlu0 %498
    %v501 = vsel %vm172, %v499, 0
    %503 = vmatprep.subr.bf16.mxu0 0
    %504 = vmatpush1.bf16.msra.mxu0 0
    %505 = vmatprep.subr.bf16.mxu0 0
    %506 = vmatpush1.bf16.msra.mxu0 0
    %507 = vmatprep.subr.bf16.mxu0 0
    %508 = vmatpush1.bf16.msra.mxu0 0
    %509 = vmatprep.subr.bf16.mxu0 0
    %510 = vmatpush1.bf16.msra.mxu0 0
    %511 = vmatprep.subr.bf16.mxu0 0
    %512 = vmatpush1.bf16.msra.mxu0 0
    %513 = vmatprep.subr.bf16.mxu0 0
    %514 = vmatpush1.bf16.msra.mxu0 0
    %515 = vmatprep.subr.bf16.mxu0 0
    %516 = vmatpush1.bf16.msra.mxu0 %v169
    %517 = vmatprep.subr.bf16.mxu0 0
    %518 = vmatpush1.bf16.msra.mxu0 %v168
    %519 = vmatprep.subr.bf16.mxu0 0
    %520 = vmatpush2.bf16.msra.mxu0 0
    %521 = vmatprep.subr.bf16.mxu0 0
    %522 = vmatpush2.bf16.msra.mxu0 0
    %523 = vmatprep.subr.bf16.mxu0 0
    %524 = vmatpush2.bf16.msra.mxu0 0
    %525 = vmatprep.subr.bf16.mxu0 0
    %526 = vmatpush2.bf16.msra.mxu0 0
    %527 = vmatprep.subr.bf16.mxu0 0
    %528 = vmatpush2.bf16.msra.mxu0 0
    %529 = vmatprep.subr.bf16.mxu0 0
    %530 = vmatpush2.bf16.msra.mxu0 0
    %531 = vmatprep.subr.bf16.mxu0 0
    %532 = vmatpush2.bf16.msra.mxu0 0
    %533 = vmatprep.subr.bf16.mxu0 0
    %534 = vmatpush2.bf16.msra.mxu0 0
    %535 = vmatprep.mubr.bf16.mxu0 0
    %536 = vmatmul.mubr.bf16.gmra.mxu0 %v501
    %v537 = vpop.f32.mrf.mxu0
    %v538 = vadd.f32 %v155, %v537
    %v539 = vpop.f32.mrf.mxu0
    %v540 = vpop.f32.mrf.mxu0
    %v541 = vpop.f32.mrf.mxu0
    %542 = vdwg.mxu0
    %v543 = vadd.f32 %v495, %v538
    %v544 = vxor.u32 %v543, 2147483648
    %v545 = vmul.f32 %v544, 1.442695
    %v546 = vpow.pop %v545
    %v547 = vadd.f32 %v546, 1.0
    %v548 = vrcp.pop %v547
    %v549 = vmul.f32 1.0, %v548
    %551 = vrot.lane.b32.xlu0 %v538, 64
    %v552 = vpop.permute.xlu0 %551
    %v554 = vmul.f32 %v549, %v552
    %556 = vrot.lane.b32.xlu0 %v554, 64
    %v557 = vpop.permute.xlu0 %556
    %v559 = vadd.f32 %v495, %v557
    %v560 = vtanh.pop %v559
    %v561 = vsub.f32 1.0, %v549
    %563 = vrot.lane.b32.xlu0 %v560, 96
    %v564 = vpop.permute.xlu0 %563
    %v566 = vmul.f32 %v561, %v564
    %v567 = vmul.f32 %v549, %v487
    %v568 = vadd.f32 %v566, %v567
    %570 = vrot.lane.b32.xlu0 %v568, 96
    %v571 = vpop.permute.xlu0 %570
    %s573 = scalar_lea.vmem %s8, 32
    %574 = vst.msk [vmem:[%s573] sm:$0xff] %vm172, %v571
    %s575 = scalar_lea.vmem [#allocation2], 40
    %v576 = vld [vmem:[%s575] sm:$0xff]
    %v577 = vpack.c.bf16 %v568, %v568
    %579 = vrot.lane.b32.xlu0 %v577, 96
    %v580 = vpop.permute.xlu0 %579
    %v582 = vsel %vm172, %v580, 0
    %584 = vmatprep.subr.bf16.mxu0 0
    %585 = vmatpush1.bf16.msra.mxu0 0
    %586 = vmatprep.subr.bf16.mxu0 0
    %587 = vmatpush1.bf16.msra.mxu0 0
    %588 = vmatprep.subr.bf16.mxu0 0
    %589 = vmatpush1.bf16.msra.mxu0 0
    %590 = vmatprep.subr.bf16.mxu0 0
    %591 = vmatpush1.bf16.msra.mxu0 0
    %592 = vmatprep.subr.bf16.mxu0 0
    %593 = vmatpush1.bf16.msra.mxu0 0
    %594 = vmatprep.subr.bf16.mxu0 0
    %595 = vmatpush1.bf16.msra.mxu0 0
    %596 = vmatprep.subr.bf16.mxu0 0
    %597 = vmatpush1.bf16.msra.mxu0 %v169
    %598 = vmatprep.subr.bf16.mxu0 0
    %599 = vmatpush1.bf16.msra.mxu0 %v168
    %600 = vmatprep.subr.bf16.mxu0 0
    %601 = vmatpush2.bf16.msra.mxu0 0
    %602 = vmatprep.subr.bf16.mxu0 0
    %603 = vmatpush2.bf16.msra.mxu0 0
    %604 = vmatprep.subr.bf16.mxu0 0
    %605 = vmatpush2.bf16.msra.mxu0 0
    %606 = vmatprep.subr.bf16.mxu0 0
    %607 = vmatpush2.bf16.msra.mxu0 0
    %608 = vmatprep.subr.bf16.mxu0 0
    %609 = vmatpush2.bf16.msra.mxu0 0
    %610 = vmatprep.subr.bf16.mxu0 0
    %611 = vmatpush2.bf16.msra.mxu0 0
    %612 = vmatprep.subr.bf16.mxu0 0
    %613 = vmatpush2.bf16.msra.mxu0 0
    %614 = vmatprep.subr.bf16.mxu0 0
    %615 = vmatpush2.bf16.msra.mxu0 0
    %616 = vmatprep.mubr.bf16.mxu0 0
    %617 = vmatmul.mubr.bf16.gmra.mxu0 %v582
    %v618 = vpop.f32.mrf.mxu0
    %v619 = vadd.f32 %v155, %v618
    %v620 = vpop.f32.mrf.mxu0
    %v621 = vpop.f32.mrf.mxu0
    %v622 = vpop.f32.mrf.mxu0
    %623 = vdwg.mxu0
    %v624 = vadd.f32 %v576, %v619
    %v625 = vxor.u32 %v624, 2147483648
    %v626 = vmul.f32 %v625, 1.442695
    %v627 = vpow.pop %v626
    %v628 = vadd.f32 %v627, 1.0
    %v629 = vrcp.pop %v628
    %v630 = vmul.f32 1.0, %v629
    %632 = vrot.lane.b32.xlu0 %v619, 64
    %v633 = vpop.permute.xlu0 %632
    %v635 = vmul.f32 %v630, %v633
    %637 = vrot.lane.b32.xlu0 %v635, 64
    %v638 = vpop.permute.xlu0 %637
    %v640 = vadd.f32 %v576, %v638
    %v641 = vtanh.pop %v640
    %v642 = vsub.f32 1.0, %v630
    %644 = vrot.lane.b32.xlu0 %v641, 96
    %v645 = vpop.permute.xlu0 %644
    %v647 = vmul.f32 %v642, %v645
    %v648 = vmul.f32 %v630, %v568
    %v649 = vadd.f32 %v647, %v648
    %651 = vrot.lane.b32.xlu0 %v649, 96
    %v652 = vpop.permute.xlu0 %651
    %s654 = scalar_lea.vmem %s8, 40
    %655 = vst.msk [vmem:[%s654] sm:$0xff] %vm172, %v652
    %s656 = scalar_lea.vmem [#allocation2], 48
    %v657 = vld [vmem:[%s656] sm:$0xff]
    %v658 = vpack.c.bf16 %v649, %v649
    %660 = vrot.lane.b32.xlu0 %v658, 96
    %v661 = vpop.permute.xlu0 %660
    %v663 = vsel %vm172, %v661, 0
    %665 = vmatprep.subr.bf16.mxu0 0
    %666 = vmatpush1.bf16.msra.mxu0 0
    %667 = vmatprep.subr.bf16.mxu0 0
    %668 = vmatpush1.bf16.msra.mxu0 0
    %669 = vmatprep.subr.bf16.mxu0 0
    %670 = vmatpush1.bf16.msra.mxu0 0
    %671 = vmatprep.subr.bf16.mxu0 0
    %672 = vmatpush1.bf16.msra.mxu0 0
    %673 = vmatprep.subr.bf16.mxu0 0
    %674 = vmatpush1.bf16.msra.mxu0 0
    %675 = vmatprep.subr.bf16.mxu0 0
    %676 = vmatpush1.bf16.msra.mxu0 0
    %677 = vmatprep.subr.bf16.mxu0 0
    %678 = vmatpush1.bf16.msra.mxu0 %v169
    %679 = vmatprep.subr.bf16.mxu0 0
    %680 = vmatpush1.bf16.msra.mxu0 %v168
    %681 = vmatprep.subr.bf16.mxu0 0
    %682 = vmatpush2.bf16.msra.mxu0 0
    %683 = vmatprep.subr.bf16.mxu0 0
    %684 = vmatpush2.bf16.msra.mxu0 0
    %685 = vmatprep.subr.bf16.mxu0 0
    %686 = vmatpush2.bf16.msra.mxu0 0
    %687 = vmatprep.subr.bf16.mxu0 0
    %688 = vmatpush2.bf16.msra.mxu0 0
    %689 = vmatprep.subr.bf16.mxu0 0
    %690 = vmatpush2.bf16.msra.mxu0 0
    %691 = vmatprep.subr.bf16.mxu0 0
    %692 = vmatpush2.bf16.msra.mxu0 0
    %693 = vmatprep.subr.bf16.mxu0 0
    %694 = vmatpush2.bf16.msra.mxu0 0
    %695 = vmatprep.subr.bf16.mxu0 0
    %696 = vmatpush2.bf16.msra.mxu0 0
    %697 = vmatprep.mubr.bf16.mxu0 0
    %698 = vmatmul.mubr.bf16.gmra.mxu0 %v663
    %v699 = vpop.f32.mrf.mxu0
    %v700 = vadd.f32 %v155, %v699
    %v701 = vpop.f32.mrf.mxu0
    %v702 = vpop.f32.mrf.mxu0
    %v703 = vpop.f32.mrf.mxu0
    %704 = vdwg.mxu0
    %v705 = vadd.f32 %v657, %v700
    %v706 = vxor.u32 %v705, 2147483648
    %v707 = vmul.f32 %v706, 1.442695
    %v708 = vpow.pop %v707
    %v709 = vadd.f32 %v708, 1.0
    %v710 = vrcp.pop %v709
    %v711 = vmul.f32 1.0, %v710
    %713 = vrot.lane.b32.xlu0 %v700, 64
    %v714 = vpop.permute.xlu0 %713
    %v716 = vmul.f32 %v711, %v714
    %718 = vrot.lane.b32.xlu0 %v716, 64
    %v719 = vpop.permute.xlu0 %718
    %v721 = vadd.f32 %v657, %v719
    %v722 = vtanh.pop %v721
    %v723 = vsub.f32 1.0, %v711
    %725 = vrot.lane.b32.xlu0 %v722, 96
    %v726 = vpop.permute.xlu0 %725
    %v728 = vmul.f32 %v723, %v726
    %v729 = vmul.f32 %v711, %v649
    %v730 = vadd.f32 %v728, %v729
    %732 = vrot.lane.b32.xlu0 %v730, 96
    %v733 = vpop.permute.xlu0 %732
    %s735 = scalar_lea.vmem %s8, 48
    %736 = vst.msk [vmem:[%s735] sm:$0xff] %vm172, %v733
    %s737 = scalar_lea.vmem [#allocation2], 56
    %v738 = vld [vmem:[%s737] sm:$0xff]
    %v739 = vpack.c.bf16 %v730, %v730
    %741 = vrot.lane.b32.xlu0 %v739, 96
    %v742 = vpop.permute.xlu0 %741
    %v744 = vsel %vm172, %v742, 0
    %746 = vmatprep.subr.bf16.mxu0 0
    %747 = vmatpush1.bf16.msra.mxu0 0
    %748 = vmatprep.subr.bf16.mxu0 0
    %749 = vmatpush1.bf16.msra.mxu0 0
    %750 = vmatprep.subr.bf16.mxu0 0
    %751 = vmatpush1.bf16.msra.mxu0 0
    %752 = vmatprep.subr.bf16.mxu0 0
    %753 = vmatpush1.bf16.msra.mxu0 0
    %754 = vmatprep.subr.bf16.mxu0 0
    %755 = vmatpush1.bf16.msra.mxu0 0
    %756 = vmatprep.subr.bf16.mxu0 0
    %757 = vmatpush1.bf16.msra.mxu0 0
    %758 = vmatprep.subr.bf16.mxu0 0
    %759 = vmatpush1.bf16.msra.mxu0 %v169
    %760 = vmatprep.subr.bf16.mxu0 0
    %761 = vmatpush1.bf16.msra.mxu0 %v168
    %762 = vmatprep.subr.bf16.mxu0 0
    %763 = vmatpush2.bf16.msra.mxu0 0
    %764 = vmatprep.subr.bf16.mxu0 0
    %765 = vmatpush2.bf16.msra.mxu0 0
    %766 = vmatprep.subr.bf16.mxu0 0
    %767 = vmatpush2.bf16.msra.mxu0 0
    %768 = vmatprep.subr.bf16.mxu0 0
    %769 = vmatpush2.bf16.msra.mxu0 0
    %770 = vmatprep.subr.bf16.mxu0 0
    %771 = vmatpush2.bf16.msra.mxu0 0
    %772 = vmatprep.subr.bf16.mxu0 0
    %773 = vmatpush2.bf16.msra.mxu0 0
    %774 = vmatprep.subr.bf16.mxu0 0
    %775 = vmatpush2.bf16.msra.mxu0 0
    %776 = vmatprep.subr.bf16.mxu0 0
    %777 = vmatpush2.bf16.msra.mxu0 0
    %778 = vmatprep.mubr.bf16.mxu0 0
    %779 = vmatmul.mubr.bf16.gmra.mxu0 %v744
    %v780 = vpop.f32.mrf.mxu0
    %v781 = vadd.f32 %v155, %v780
    %v782 = vpop.f32.mrf.mxu0
    %v783 = vpop.f32.mrf.mxu0
    %v784 = vpop.f32.mrf.mxu0
    %785 = vdwg.mxu0
    %v786 = vadd.f32 %v738, %v781
    %v787 = vxor.u32 %v786, 2147483648
    %v788 = vmul.f32 %v787, 1.442695
    %v789 = vpow.pop %v788
    %v790 = vadd.f32 %v789, 1.0
    %v791 = vrcp.pop %v790
    %v792 = vmul.f32 1.0, %v791
    %794 = vrot.lane.b32.xlu0 %v781, 64
    %v795 = vpop.permute.xlu0 %794
    %v797 = vmul.f32 %v792, %v795
    %799 = vrot.lane.b32.xlu0 %v797, 64
    %v800 = vpop.permute.xlu0 %799
    %v802 = vadd.f32 %v738, %v800
    %v803 = vtanh.pop %v802
    %v804 = vsub.f32 1.0, %v792
    %806 = vrot.lane.b32.xlu0 %v803, 96
    %v807 = vpop.permute.xlu0 %806
    %v809 = vmul.f32 %v804, %v807
    %v810 = vmul.f32 %v792, %v730
    %v811 = vadd.f32 %v809, %v810
    %813 = vrot.lane.b32.xlu0 %v811, 96
    %v814 = vpop.permute.xlu0 %813
    %s816 = scalar_lea.vmem %s8, 56
    %817 = vst.msk [vmem:[%s816] sm:$0xff] %vm172, %v814
    %818 = vst.msk [vmem:[#allocation3] sm:$0xff] %vm172, %v814
    %v819 = vld [vmem:[%s8] sm:$0xff]
    %v820 = vld [vmem:[%s8 + $0x8] sm:$0xff]
    %v821 = vld [vmem:[%s8 + $0x10] sm:$0xff]
    %v822 = vld [vmem:[%s8 + $0x18] sm:$0xff]
    %v823 = vld [vmem:[%s8 + $0x20] sm:$0xff]
    %v824 = vld [vmem:[%s8 + $0x28] sm:$0xff]
    %v825 = vld [vmem:[%s8 + $0x30] sm:$0xff]
    %v826 = vld [vmem:[%s8 + $0x38] sm:$0xff]
    %v827 = vld [vmem:[%s3] sm:$0xf]
    %v828 = vld [vmem:[%s3 + $0x4] sm:$0xf]
    %v829 = vld [vmem:[%s3 + $0x8] sm:$0xf]
    %v830 = vld [vmem:[%s3 + $0xc] sm:$0xf]
    %v831 = vld [vmem:[%s4] sm:$0x1]
    %v832 = vpack.c.bf16 %v820, %v819
    %v833 = vpack.c.bf16 %v822, %v821
    %v834 = vpack.c.bf16 %v824, %v823
    %v835 = vpack.c.bf16 %v826, %v825
    %v837 = vlaneseq
    %v838 = vshrl.u32 %v837, 7
    %v839 = vsub.s32 0, %v838
    %v840 = vrot.slane %v831, %v839
    %v846 = vunpack.c.l.b16 %v827
    %v847 = vunpack.c.l.b16 %v828
    %v848 = vunpack.c.l.b16 %v829
    %v849 = vunpack.c.l.b16 %v830
    %v850 = vpack.c.b16 %v847, %v846
    %v851 = vpack.c.b16 %v849, %v848
    %v855 = vsel %vm172, %v832, 0
    %v858 = vsel %vm172, %v833, 0
    %v861 = vsel %vm172, %v834, 0
    %v864 = vsel %vm172, %v835, 0
    %866 = vmatprep.subr.bf16.mxu0 0
    %867 = vmatpush1.bf16.msra.mxu0 0
    %868 = vmatprep.subr.bf16.mxu0 0
    %869 = vmatpush1.bf16.msra.mxu0 0
    %870 = vmatprep.subr.bf16.mxu0 0
    %871 = vmatpush1.bf16.msra.mxu0 0
    %872 = vmatprep.subr.bf16.mxu0 0
    %873 = vmatpush1.bf16.msra.mxu0 0
    %874 = vmatprep.subr.bf16.mxu0 0
    %875 = vmatpush1.bf16.msra.mxu0 0
    %876 = vmatprep.subr.bf16.mxu0 0
    %877 = vmatpush1.bf16.msra.mxu0 0
    %878 = vmatprep.subr.bf16.mxu0 0
    %879 = vmatpush1.bf16.msra.mxu0 %v851
    %880 = vmatprep.subr.bf16.mxu0 0
    %881 = vmatpush1.bf16.msra.mxu0 %v850
    %882 = vmatprep.subr.bf16.mxu0 0
    %883 = vmatpush2.bf16.msra.mxu0 0
    %884 = vmatprep.subr.bf16.mxu0 0
    %885 = vmatpush2.bf16.msra.mxu0 0
    %886 = vmatprep.subr.bf16.mxu0 0
    %887 = vmatpush2.bf16.msra.mxu0 0
    %888 = vmatprep.subr.bf16.mxu0 0
    %889 = vmatpush2.bf16.msra.mxu0 0
    %890 = vmatprep.subr.bf16.mxu0 0
    %891 = vmatpush2.bf16.msra.mxu0 0
    %892 = vmatprep.subr.bf16.mxu0 0
    %893 = vmatpush2.bf16.msra.mxu0 0
    %894 = vmatprep.subr.bf16.mxu0 0
    %895 = vmatpush2.bf16.msra.mxu0 0
    %896 = vmatprep.subr.bf16.mxu0 0
    %897 = vmatpush2.bf16.msra.mxu0 0
    %898 = vmatprep.mubr.bf16.mxu0 0
    %899 = vmatmul.mubr.bf16.gmra.mxu0 %v855
    %v900 = vpop.f32.mrf.mxu0
    %v901 = vadd.f32 %v840, %v900
    %v902 = vpop.f32.mrf.mxu0
    %v903 = vpop.f32.mrf.mxu0
    %v904 = vadd.f32 %v840, %v903
    %v905 = vpop.f32.mrf.mxu0
    %906 = vmatprep.mubr.bf16.mxu0 0
    %907 = vmatmul.mubr.bf16.gmra.mxu0 %v858
    %v908 = vpop.f32.mrf.mxu0
    %v909 = vadd.f32 %v840, %v908
    %v910 = vpop.f32.mrf.mxu0
    %v911 = vpop.f32.mrf.mxu0
    %v912 = vadd.f32 %v840, %v911
    %v913 = vpop.f32.mrf.mxu0
    %914 = vmatprep.mubr.bf16.mxu0 0
    %915 = vmatmul.mubr.bf16.gmra.mxu0 %v861
    %v916 = vpop.f32.mrf.mxu0
    %v917 = vadd.f32 %v840, %v916
    %v918 = vpop.f32.mrf.mxu0
    %v919 = vpop.f32.mrf.mxu0
    %v920 = vadd.f32 %v840, %v919
    %v921 = vpop.f32.mrf.mxu0
    %922 = vmatprep.mubr.bf16.mxu0 0
    %923 = vmatmul.mubr.bf16.gmra.mxu0 %v864
    %v924 = vpop.f32.mrf.mxu0
    %v925 = vadd.f32 %v840, %v924
    %v926 = vpop.f32.mrf.mxu0
    %v927 = vpop.f32.mrf.mxu0
    %v928 = vadd.f32 %v840, %v927
    %v929 = vpop.f32.mrf.mxu0
    %930 = vdwg.mxu0
    %931 = vst [vmem:[#allocation2] sm:$0xff] %v901
    %932 = vst [vmem:[#allocation2 + $0x8] sm:$0xff] %v904
    %933 = vst [vmem:[#allocation2 + $0x10] sm:$0xff] %v909
    %934 = vst [vmem:[#allocation2 + $0x18] sm:$0xff] %v912
    %935 = vst [vmem:[#allocation2 + $0x20] sm:$0xff] %v917
    %936 = vst [vmem:[#allocation2 + $0x28] sm:$0xff] %v920
    %937 = vst [vmem:[#allocation2 + $0x30] sm:$0xff] %v925
    %938 = vst [vmem:[#allocation2 + $0x38] sm:$0xff] %v928
    %s939 = scalar_lea.vmem %s5, 16
    %v940 = vld [vmem:[%s939] sm:$0xf]
    %v941 = vld [vmem:[%s939 + $0x4] sm:$0xf]
    %v942 = vld [vmem:[%s939 + $0x8] sm:$0xf]
    %v943 = vld [vmem:[%s939 + $0xc] sm:$0xf]
    %s944 = scalar_lea.vmem %s6, 1
    %v945 = vld [vmem:[%s944] sm:$0x1]
    %v947 = vlaneseq
    %v948 = vshrl.u32 %v947, 7
    %v949 = vsub.s32 0, %v948
    %v950 = vrot.slane %v945, %v949
    %s952 = scalar_lea.vmem %s7, 8
    %v953 = vld [vmem:[%s952] sm:$0xff]
    %v954 = vld [vmem:[#allocation2] sm:$0xff]
    %v955 = vpack.c.bf16 %v953, %v953
    %v960 = vunpack.c.l.b16 %v940
    %v961 = vunpack.c.l.b16 %v941
    %v962 = vunpack.c.l.b16 %v942
    %v963 = vunpack.c.l.b16 %v943
    %v964 = vpack.c.b16 %v961, %v960
    %v965 = vpack.c.b16 %v963, %v962
    %v969 = vsel %vm172, %v955, 0
    %971 = vmatprep.subr.bf16.mxu0 0
    %972 = vmatpush1.bf16.msra.mxu0 0
    %973 = vmatprep.subr.bf16.mxu0 0
    %974 = vmatpush1.bf16.msra.mxu0 0
    %975 = vmatprep.subr.bf16.mxu0 0
    %976 = vmatpush1.bf16.msra.mxu0 0
    %977 = vmatprep.subr.bf16.mxu0 0
    %978 = vmatpush1.bf16.msra.mxu0 0
    %979 = vmatprep.subr.bf16.mxu0 0
    %980 = vmatpush1.bf16.msra.mxu0 0
    %981 = vmatprep.subr.bf16.mxu0 0
    %982 = vmatpush1.bf16.msra.mxu0 0
    %983 = vmatprep.subr.bf16.mxu0 0
    %984 = vmatpush1.bf16.msra.mxu0 %v965
    %985 = vmatprep.subr.bf16.mxu0 0
    %986 = vmatpush1.bf16.msra.mxu0 %v964
    %987 = vmatprep.subr.bf16.mxu0 0
    %988 = vmatpush2.bf16.msra.mxu0 0
    %989 = vmatprep.subr.bf16.mxu0 0
    %990 = vmatpush2.bf16.msra.mxu0 0
    %991 = vmatprep.subr.bf16.mxu0 0
    %992 = vmatpush2.bf16.msra.mxu0 0
    %993 = vmatprep.subr.bf16.mxu0 0
    %994 = vmatpush2.bf16.msra.mxu0 0
    %995 = vmatprep.subr.bf16.mxu0 0
    %996 = vmatpush2.bf16.msra.mxu0 0
    %997 = vmatprep.subr.bf16.mxu0 0
    %998 = vmatpush2.bf16.msra.mxu0 0
    %999 = vmatprep.subr.bf16.mxu0 0
    %1000 = vmatpush2.bf16.msra.mxu0 0
    %1001 = vmatprep.subr.bf16.mxu0 0
    %1002 = vmatpush2.bf16.msra.mxu0 0
    %1003 = vmatprep.mubr.bf16.mxu0 0
    %1004 = vmatmul.mubr.bf16.gmra.mxu0 %v969
    %v1005 = vpop.f32.mrf.mxu0
    %v1006 = vadd.f32 %v950, %v1005
    %v1007 = vpop.f32.mrf.mxu0
    %v1008 = vpop.f32.mrf.mxu0
    %v1009 = vpop.f32.mrf.mxu0
    %1010 = vdwg.mxu0
    %v1011 = vadd.f32 %v954, %v1006
    %v1012 = vxor.u32 %v1011, 2147483648
    %v1013 = vmul.f32 %v1012, 1.442695
    %v1014 = vpow.pop %v1013
    %v1015 = vadd.f32 %v1014, 1.0
    %v1016 = vrcp.pop %v1015
    %v1017 = vmul.f32 1.0, %v1016
    %1019 = vrot.lane.b32.xlu0 %v1006, 64
    %v1020 = vpop.permute.xlu0 %1019
    %v1022 = vmul.f32 %v1017, %v1020
    %1024 = vrot.lane.b32.xlu0 %v1022, 64
    %v1025 = vpop.permute.xlu0 %1024
    %v1027 = vadd.f32 %v954, %v1025
    %v1028 = vtanh.pop %v1027
    %v1029 = vsub.f32 1.0, %v1017
    %1031 = vrot.lane.b32.xlu0 %v1028, 96
    %v1032 = vpop.permute.xlu0 %1031
    %v1034 = vmul.f32 %v1029, %v1032
    %1036 = vrot.lane.b32.xlu0 %v953, 32
    %v1037 = vpop.permute.xlu0 %1036
    %v1039 = vmul.f32 %v1017, %v1037
    %v1040 = vadd.f32 %v1034, %v1039
    %1042 = vrot.lane.b32.xlu0 %v1040, 96
    %v1043 = vpop.permute.xlu0 %1042
    %1045 = vst.msk [vmem:[%s8] sm:$0xff] %vm172, %v1043
    %v1046 = vld [vmem:[%s251] sm:$0xff]
    %v1047 = vpack.c.bf16 %v1040, %v1040
    %1049 = vrot.lane.b32.xlu0 %v1047, 96
    %v1050 = vpop.permute.xlu0 %1049
    %v1052 = vsel %vm172, %v1050, 0
    %1054 = vmatprep.subr.bf16.mxu0 0
    %1055 = vmatpush1.bf16.msra.mxu0 0
    %1056 = vmatprep.subr.bf16.mxu0 0
    %1057 = vmatpush1.bf16.msra.mxu0 0
    %1058 = vmatprep.subr.bf16.mxu0 0
    %1059 = vmatpush1.bf16.msra.mxu0 0
    %1060 = vmatprep.subr.bf16.mxu0 0
    %1061 = vmatpush1.bf16.msra.mxu0 0
    %1062 = vmatprep.subr.bf16.mxu0 0
    %1063 = vmatpush1.bf16.msra.mxu0 0
    %1064 = vmatprep.subr.bf16.mxu0 0
    %1065 = vmatpush1.bf16.msra.mxu0 0
    %1066 = vmatprep.subr.bf16.mxu0 0
    %1067 = vmatpush1.bf16.msra.mxu0 %v965
    %1068 = vmatprep.subr.bf16.mxu0 0
    %1069 = vmatpush1.bf16.msra.mxu0 %v964
    %1070 = vmatprep.subr.bf16.mxu0 0
    %1071 = vmatpush2.bf16.msra.mxu0 0
    %1072 = vmatprep.subr.bf16.mxu0 0
    %1073 = vmatpush2.bf16.msra.mxu0 0
    %1074 = vmatprep.subr.bf16.mxu0 0
    %1075 = vmatpush2.bf16.msra.mxu0 0
    %1076 = vmatprep.subr.bf16.mxu0 0
    %1077 = vmatpush2.bf16.msra.mxu0 0
    %1078 = vmatprep.subr.bf16.mxu0 0
    %1079 = vmatpush2.bf16.msra.mxu0 0
    %1080 = vmatprep.subr.bf16.mxu0 0
    %1081 = vmatpush2.bf16.msra.mxu0 0
    %1082 = vmatprep.subr.bf16.mxu0 0
    %1083 = vmatpush2.bf16.msra.mxu0 0
    %1084 = vmatprep.subr.bf16.mxu0 0
    %1085 = vmatpush2.bf16.msra.mxu0 0
    %1086 = vmatprep.mubr.bf16.mxu0 0
    %1087 = vmatmul.mubr.bf16.gmra.mxu0 %v1052
    %v1088 = vpop.f32.mrf.mxu0
    %v1089 = vadd.f32 %v950, %v1088
    %v1090 = vpop.f32.mrf.mxu0
    %v1091 = vpop.f32.mrf.mxu0
    %v1092 = vpop.f32.mrf.mxu0
    %1093 = vdwg.mxu0
    %v1094 = vadd.f32 %v1046, %v1089
    %v1095 = vxor.u32 %v1094, 2147483648
    %v1096 = vmul.f32 %v1095, 1.442695
    %v1097 = vpow.pop %v1096
    %v1098 = vadd.f32 %v1097, 1.0
    %v1099 = vrcp.pop %v1098
    %v1100 = vmul.f32 1.0, %v1099
    %1102 = vrot.lane.b32.xlu0 %v1089, 64
    %v1103 = vpop.permute.xlu0 %1102
    %v1105 = vmul.f32 %v1100, %v1103
    %1107 = vrot.lane.b32.xlu0 %v1105, 64
    %v1108 = vpop.permute.xlu0 %1107
    %v1110 = vadd.f32 %v1046, %v1108
    %v1111 = vtanh.pop %v1110
    %v1112 = vsub.f32 1.0, %v1100
    %1114 = vrot.lane.b32.xlu0 %v1111, 96
    %v1115 = vpop.permute.xlu0 %1114
    %v1117 = vmul.f32 %v1112, %v1115
    %v1118 = vmul.f32 %v1100, %v1040
    %v1119 = vadd.f32 %v1117, %v1118
    %1121 = vrot.lane.b32.xlu0 %v1119, 96
    %v1122 = vpop.permute.xlu0 %1121
    %1124 = vst.msk [vmem:[%s330] sm:$0xff] %vm172, %v1122
    %v1125 = vld [vmem:[%s332] sm:$0xff]
    %v1126 = vpack.c.bf16 %v1119, %v1119
    %1128 = vrot.lane.b32.xlu0 %v1126, 96
    %v1129 = vpop.permute.xlu0 %1128
    %v1131 = vsel %vm172, %v1129, 0
    %1133 = vmatprep.subr.bf16.mxu0 0
    %1134 = vmatpush1.bf16.msra.mxu0 0
    %1135 = vmatprep.subr.bf16.mxu0 0
    %1136 = vmatpush1.bf16.msra.mxu0 0
    %1137 = vmatprep.subr.bf16.mxu0 0
    %1138 = vmatpush1.bf16.msra.mxu0 0
    %1139 = vmatprep.subr.bf16.mxu0 0
    %1140 = vmatpush1.bf16.msra.mxu0 0
    %1141 = vmatprep.subr.bf16.mxu0 0
    %1142 = vmatpush1.bf16.msra.mxu0 0
    %1143 = vmatprep.subr.bf16.mxu0 0
    %1144 = vmatpush1.bf16.msra.mxu0 0
    %1145 = vmatprep.subr.bf16.mxu0 0
    %1146 = vmatpush1.bf16.msra.mxu0 %v965
    %1147 = vmatprep.subr.bf16.mxu0 0
    %1148 = vmatpush1.bf16.msra.mxu0 %v964
    %1149 = vmatprep.subr.bf16.mxu0 0
    %1150 = vmatpush2.bf16.msra.mxu0 0
    %1151 = vmatprep.subr.bf16.mxu0 0
    %1152 = vmatpush2.bf16.msra.mxu0 0
    %1153 = vmatprep.subr.bf16.mxu0 0
    %1154 = vmatpush2.bf16.msra.mxu0 0
    %1155 = vmatprep.subr.bf16.mxu0 0
    %1156 = vmatpush2.bf16.msra.mxu0 0
    %1157 = vmatprep.subr.bf16.mxu0 0
    %1158 = vmatpush2.bf16.msra.mxu0 0
    %1159 = vmatprep.subr.bf16.mxu0 0
    %1160 = vmatpush2.bf16.msra.mxu0 0
    %1161 = vmatprep.subr.bf16.mxu0 0
    %1162 = vmatpush2.bf16.msra.mxu0 0
    %1163 = vmatprep.subr.bf16.mxu0 0
    %1164 = vmatpush2.bf16.msra.mxu0 0
    %1165 = vmatprep.mubr.bf16.mxu0 0
    %1166 = vmatmul.mubr.bf16.gmra.mxu0 %v1131
    %v1167 = vpop.f32.mrf.mxu0
    %v1168 = vadd.f32 %v950, %v1167
    %v1169 = vpop.f32.mrf.mxu0
    %v1170 = vpop.f32.mrf.mxu0
    %v1171 = vpop.f32.mrf.mxu0
    %1172 = vdwg.mxu0
    %v1173 = vadd.f32 %v1125, %v1168
    %v1174 = vxor.u32 %v1173, 2147483648
    %v1175 = vmul.f32 %v1174, 1.442695
    %v1176 = vpow.pop %v1175
    %v1177 = vadd.f32 %v1176, 1.0
    %v1178 = vrcp.pop %v1177
    %v1179 = vmul.f32 1.0, %v1178
    %1181 = vrot.lane.b32.xlu0 %v1168, 64
    %v1182 = vpop.permute.xlu0 %1181
    %v1184 = vmul.f32 %v1179, %v1182
    %1186 = vrot.lane.b32.xlu0 %v1184, 64
    %v1187 = vpop.permute.xlu0 %1186
    %v1189 = vadd.f32 %v1125, %v1187
    %v1190 = vtanh.pop %v1189
    %v1191 = vsub.f32 1.0, %v1179
    %1193 = vrot.lane.b32.xlu0 %v1190, 96
    %v1194 = vpop.permute.xlu0 %1193
    %v1196 = vmul.f32 %v1191, %v1194
    %v1197 = vmul.f32 %v1179, %v1119
    %v1198 = vadd.f32 %v1196, %v1197
    %1200 = vrot.lane.b32.xlu0 %v1198, 96
    %v1201 = vpop.permute.xlu0 %1200
    %1203 = vst.msk [vmem:[%s411] sm:$0xff] %vm172, %v1201
    %v1204 = vld [vmem:[%s413] sm:$0xff]
    %v1205 = vpack.c.bf16 %v1198, %v1198
    %1207 = vrot.lane.b32.xlu0 %v1205, 96
    %v1208 = vpop.permute.xlu0 %1207
    %v1210 = vsel %vm172, %v1208, 0
    %1212 = vmatprep.subr.bf16.mxu0 0
    %1213 = vmatpush1.bf16.msra.mxu0 0
    %1214 = vmatprep.subr.bf16.mxu0 0
    %1215 = vmatpush1.bf16.msra.mxu0 0
    %1216 = vmatprep.subr.bf16.mxu0 0
    %1217 = vmatpush1.bf16.msra.mxu0 0
    %1218 = vmatprep.subr.bf16.mxu0 0
    %1219 = vmatpush1.bf16.msra.mxu0 0
    %1220 = vmatprep.subr.bf16.mxu0 0
    %1221 = vmatpush1.bf16.msra.mxu0 0
    %1222 = vmatprep.subr.bf16.mxu0 0
    %1223 = vmatpush1.bf16.msra.mxu0 0
    %1224 = vmatprep.subr.bf16.mxu0 0
    %1225 = vmatpush1.bf16.msra.mxu0 %v965
    %1226 = vmatprep.subr.bf16.mxu0 0
    %1227 = vmatpush1.bf16.msra.mxu0 %v964
    %1228 = vmatprep.subr.bf16.mxu0 0
    %1229 = vmatpush2.bf16.msra.mxu0 0
    %1230 = vmatprep.subr.bf16.mxu0 0
    %1231 = vmatpush2.bf16.msra.mxu0 0
    %1232 = vmatprep.subr.bf16.mxu0 0
    %1233 = vmatpush2.bf16.msra.mxu0 0
    %1234 = vmatprep.subr.bf16.mxu0 0
    %1235 = vmatpush2.bf16.msra.mxu0 0
    %1236 = vmatprep.subr.bf16.mxu0 0
    %1237 = vmatpush2.bf16.msra.mxu0 0
    %1238 = vmatprep.subr.bf16.mxu0 0
    %1239 = vmatpush2.bf16.msra.mxu0 0
    %1240 = vmatprep.subr.bf16.mxu0 0
    %1241 = vmatpush2.bf16.msra.mxu0 0
    %1242 = vmatprep.subr.bf16.mxu0 0
    %1243 = vmatpush2.bf16.msra.mxu0 0
    %1244 = vmatprep.mubr.bf16.mxu0 0
    %1245 = vmatmul.mubr.bf16.gmra.mxu0 %v1210
    %v1246 = vpop.f32.mrf.mxu0
    %v1247 = vadd.f32 %v950, %v1246
    %v1248 = vpop.f32.mrf.mxu0
    %v1249 = vpop.f32.mrf.mxu0
    %v1250 = vpop.f32.mrf.mxu0
    %1251 = vdwg.mxu0
    %v1252 = vadd.f32 %v1204, %v1247
    %v1253 = vxor.u32 %v1252, 2147483648
    %v1254 = vmul.f32 %v1253, 1.442695
    %v1255 = vpow.pop %v1254
    %v1256 = vadd.f32 %v1255, 1.0
    %v1257 = vrcp.pop %v1256
    %v1258 = vmul.f32 1.0, %v1257
    %1260 = vrot.lane.b32.xlu0 %v1247, 64
    %v1261 = vpop.permute.xlu0 %1260
    %v1263 = vmul.f32 %v1258, %v1261
    %1265 = vrot.lane.b32.xlu0 %v1263, 64
    %v1266 = vpop.permute.xlu0 %1265
    %v1268 = vadd.f32 %v1204, %v1266
    %v1269 = vtanh.pop %v1268
    %v1270 = vsub.f32 1.0, %v1258
    %1272 = vrot.lane.b32.xlu0 %v1269, 96
    %v1273 = vpop.permute.xlu0 %1272
    %v1275 = vmul.f32 %v1270, %v1273
    %v1276 = vmul.f32 %v1258, %v1198
    %v1277 = vadd.f32 %v1275, %v1276
    %1279 = vrot.lane.b32.xlu0 %v1277, 96
    %v1280 = vpop.permute.xlu0 %1279
    %1282 = vst.msk [vmem:[%s492] sm:$0xff] %vm172, %v1280
    %v1283 = vld [vmem:[%s494] sm:$0xff]
    %v1284 = vpack.c.bf16 %v1277, %v1277
    %1286 = vrot.lane.b32.xlu0 %v1284, 96
    %v1287 = vpop.permute.xlu0 %1286
    %v1289 = vsel %vm172, %v1287, 0
    %1291 = vmatprep.subr.bf16.mxu0 0
    %1292 = vmatpush1.bf16.msra.mxu0 0
    %1293 = vmatprep.subr.bf16.mxu0 0
    %1294 = vmatpush1.bf16.msra.mxu0 0
    %1295 = vmatprep.subr.bf16.mxu0 0
    %1296 = vmatpush1.bf16.msra.mxu0 0
    %1297 = vmatprep.subr.bf16.mxu0 0
    %1298 = vmatpush1.bf16.msra.mxu0 0
    %1299 = vmatprep.subr.bf16.mxu0 0
    %1300 = vmatpush1.bf16.msra.mxu0 0
    %1301 = vmatprep.subr.bf16.mxu0 0
    %1302 = vmatpush1.bf16.msra.mxu0 0
    %1303 = vmatprep.subr.bf16.mxu0 0
    %1304 = vmatpush1.bf16.msra.mxu0 %v965
    %1305 = vmatprep.subr.bf16.mxu0 0
    %1306 = vmatpush1.bf16.msra.mxu0 %v964
    %1307 = vmatprep.subr.bf16.mxu0 0
    %1308 = vmatpush2.bf16.msra.mxu0 0
    %1309 = vmatprep.subr.bf16.mxu0 0
    %1310 = vmatpush2.bf16.msra.mxu0 0
    %1311 = vmatprep.subr.bf16.mxu0 0
    %1312 = vmatpush2.bf16.msra.mxu0 0
    %1313 = vmatprep.subr.bf16.mxu0 0
    %1314 = vmatpush2.bf16.msra.mxu0 0
    %1315 = vmatprep.subr.bf16.mxu0 0
    %1316 = vmatpush2.bf16.msra.mxu0 0
    %1317 = vmatprep.subr.bf16.mxu0 0
    %1318 = vmatpush2.bf16.msra.mxu0 0
    %1319 = vmatprep.subr.bf16.mxu0 0
    %1320 = vmatpush2.bf16.msra.mxu0 0
    %1321 = vmatprep.subr.bf16.mxu0 0
    %1322 = vmatpush2.bf16.msra.mxu0 0
    %1323 = vmatprep.mubr.bf16.mxu0 0
    %1324 = vmatmul.mubr.bf16.gmra.mxu0 %v1289
    %v1325 = vpop.f32.mrf.mxu0
    %v1326 = vadd.f32 %v950, %v1325
    %v1327 = vpop.f32.mrf.mxu0
    %v1328 = vpop.f32.mrf.mxu0
    %v1329 = vpop.f32.mrf.mxu0
    %1330 = vdwg.mxu0
    %v1331 = vadd.f32 %v1283, %v1326
    %v1332 = vxor.u32 %v1331, 2147483648
    %v1333 = vmul.f32 %v1332, 1.442695
    %v1334 = vpow.pop %v1333
    %v1335 = vadd.f32 %v1334, 1.0
    %v1336 = vrcp.pop %v1335
    %v1337 = vmul.f32 1.0, %v1336
    %1339 = vrot.lane.b32.xlu0 %v1326, 64
    %v1340 = vpop.permute.xlu0 %1339
    %v1342 = vmul.f32 %v1337, %v1340
    %1344 = vrot.lane.b32.xlu0 %v1342, 64
    %v1345 = vpop.permute.xlu0 %1344
    %v1347 = vadd.f32 %v1283, %v1345
    %v1348 = vtanh.pop %v1347
    %v1349 = vsub.f32 1.0, %v1337
    %1351 = vrot.lane.b32.xlu0 %v1348, 96
    %v1352 = vpop.permute.xlu0 %1351
    %v1354 = vmul.f32 %v1349, %v1352
    %v1355 = vmul.f32 %v1337, %v1277
    %v1356 = vadd.f32 %v1354, %v1355
    %1358 = vrot.lane.b32.xlu0 %v1356, 96
    %v1359 = vpop.permute.xlu0 %1358
    %1361 = vst.msk [vmem:[%s573] sm:$0xff] %vm172, %v1359
    %v1362 = vld [vmem:[%s575] sm:$0xff]
    %v1363 = vpack.c.bf16 %v1356, %v1356
    %1365 = vrot.lane.b32.xlu0 %v1363, 96
    %v1366 = vpop.permute.xlu0 %1365
    %v1368 = vsel %vm172, %v1366, 0
    %1370 = vmatprep.subr.bf16.mxu0 0
    %1371 = vmatpush1.bf16.msra.mxu0 0
    %1372 = vmatprep.subr.bf16.mxu0 0
    %1373 = vmatpush1.bf16.msra.mxu0 0
    %1374 = vmatprep.subr.bf16.mxu0 0
    %1375 = vmatpush1.bf16.msra.mxu0 0
    %1376 = vmatprep.subr.bf16.mxu0 0
    %1377 = vmatpush1.bf16.msra.mxu0 0
    %1378 = vmatprep.subr.bf16.mxu0 0
    %1379 = vmatpush1.bf16.msra.mxu0 0
    %1380 = vmatprep.subr.bf16.mxu0 0
    %1381 = vmatpush1.bf16.msra.mxu0 0
    %1382 = vmatprep.subr.bf16.mxu0 0
    %1383 = vmatpush1.bf16.msra.mxu0 %v965
    %1384 = vmatprep.subr.bf16.mxu0 0
    %1385 = vmatpush1.bf16.msra.mxu0 %v964
    %1386 = vmatprep.subr.bf16.mxu0 0
    %1387 = vmatpush2.bf16.msra.mxu0 0
    %1388 = vmatprep.subr.bf16.mxu0 0
    %1389 = vmatpush2.bf16.msra.mxu0 0
    %1390 = vmatprep.subr.bf16.mxu0 0
    %1391 = vmatpush2.bf16.msra.mxu0 0
    %1392 = vmatprep.subr.bf16.mxu0 0
    %1393 = vmatpush2.bf16.msra.mxu0 0
    %1394 = vmatprep.subr.bf16.mxu0 0
    %1395 = vmatpush2.bf16.msra.mxu0 0
    %1396 = vmatprep.subr.bf16.mxu0 0
    %1397 = vmatpush2.bf16.msra.mxu0 0
    %1398 = vmatprep.subr.bf16.mxu0 0
    %1399 = vmatpush2.bf16.msra.mxu0 0
    %1400 = vmatprep.subr.bf16.mxu0 0
    %1401 = vmatpush2.bf16.msra.mxu0 0
    %1402 = vmatprep.mubr.bf16.mxu0 0
    %1403 = vmatmul.mubr.bf16.gmra.mxu0 %v1368
    %v1404 = vpop.f32.mrf.mxu0
    %v1405 = vadd.f32 %v950, %v1404
    %v1406 = vpop.f32.mrf.mxu0
    %v1407 = vpop.f32.mrf.mxu0
    %v1408 = vpop.f32.mrf.mxu0
    %1409 = vdwg.mxu0
    %v1410 = vadd.f32 %v1362, %v1405
    %v1411 = vxor.u32 %v1410, 2147483648
    %v1412 = vmul.f32 %v1411, 1.442695
    %v1413 = vpow.pop %v1412
    %v1414 = vadd.f32 %v1413, 1.0
    %v1415 = vrcp.pop %v1414
    %v1416 = vmul.f32 1.0, %v1415
    %1418 = vrot.lane.b32.xlu0 %v1405, 64
    %v1419 = vpop.permute.xlu0 %1418
    %v1421 = vmul.f32 %v1416, %v1419
    %1423 = vrot.lane.b32.xlu0 %v1421, 64
    %v1424 = vpop.permute.xlu0 %1423
    %v1426 = vadd.f32 %v1362, %v1424
    %v1427 = vtanh.pop %v1426
    %v1428 = vsub.f32 1.0, %v1416
    %1430 = vrot.lane.b32.xlu0 %v1427, 96
    %v1431 = vpop.permute.xlu0 %1430
    %v1433 = vmul.f32 %v1428, %v1431
    %v1434 = vmul.f32 %v1416, %v1356
    %v1435 = vadd.f32 %v1433, %v1434
    %1437 = vrot.lane.b32.xlu0 %v1435, 96
    %v1438 = vpop.permute.xlu0 %1437
    %1440 = vst.msk [vmem:[%s654] sm:$0xff] %vm172, %v1438
    %v1441 = vld [vmem:[%s656] sm:$0xff]
    %v1442 = vpack.c.bf16 %v1435, %v1435
    %1444 = vrot.lane.b32.xlu0 %v1442, 96
    %v1445 = vpop.permute.xlu0 %1444
    %v1447 = vsel %vm172, %v1445, 0
    %1449 = vmatprep.subr.bf16.mxu0 0
    %1450 = vmatpush1.bf16.msra.mxu0 0
    %1451 = vmatprep.subr.bf16.mxu0 0
    %1452 = vmatpush1.bf16.msra.mxu0 0
    %1453 = vmatprep.subr.bf16.mxu0 0
    %1454 = vmatpush1.bf16.msra.mxu0 0
    %1455 = vmatprep.subr.bf16.mxu0 0
    %1456 = vmatpush1.bf16.msra.mxu0 0
    %1457 = vmatprep.subr.bf16.mxu0 0
    %1458 = vmatpush1.bf16.msra.mxu0 0
    %1459 = vmatprep.subr.bf16.mxu0 0
    %1460 = vmatpush1.bf16.msra.mxu0 0
    %1461 = vmatprep.subr.bf16.mxu0 0
    %1462 = vmatpush1.bf16.msra.mxu0 %v965
    %1463 = vmatprep.subr.bf16.mxu0 0
    %1464 = vmatpush1.bf16.msra.mxu0 %v964
    %1465 = vmatprep.subr.bf16.mxu0 0
    %1466 = vmatpush2.bf16.msra.mxu0 0
    %1467 = vmatprep.subr.bf16.mxu0 0
    %1468 = vmatpush2.bf16.msra.mxu0 0
    %1469 = vmatprep.subr.bf16.mxu0 0
    %1470 = vmatpush2.bf16.msra.mxu0 0
    %1471 = vmatprep.subr.bf16.mxu0 0
    %1472 = vmatpush2.bf16.msra.mxu0 0
    %1473 = vmatprep.subr.bf16.mxu0 0
    %1474 = vmatpush2.bf16.msra.mxu0 0
    %1475 = vmatprep.subr.bf16.mxu0 0
    %1476 = vmatpush2.bf16.msra.mxu0 0
    %1477 = vmatprep.subr.bf16.mxu0 0
    %1478 = vmatpush2.bf16.msra.mxu0 0
    %1479 = vmatprep.subr.bf16.mxu0 0
    %1480 = vmatpush2.bf16.msra.mxu0 0
    %1481 = vmatprep.mubr.bf16.mxu0 0
    %1482 = vmatmul.mubr.bf16.gmra.mxu0 %v1447
    %v1483 = vpop.f32.mrf.mxu0
    %v1484 = vadd.f32 %v950, %v1483
    %v1485 = vpop.f32.mrf.mxu0
    %v1486 = vpop.f32.mrf.mxu0
    %v1487 = vpop.f32.mrf.mxu0
    %1488 = vdwg.mxu0
    %v1489 = vadd.f32 %v1441, %v1484
    %v1490 = vxor.u32 %v1489, 2147483648
    %v1491 = vmul.f32 %v1490, 1.442695
    %v1492 = vpow.pop %v1491
    %v1493 = vadd.f32 %v1492, 1.0
    %v1494 = vrcp.pop %v1493
    %v1495 = vmul.f32 1.0, %v1494
    %1497 = vrot.lane.b32.xlu0 %v1484, 64
    %v1498 = vpop.permute.xlu0 %1497
    %v1500 = vmul.f32 %v1495, %v1498
    %1502 = vrot.lane.b32.xlu0 %v1500, 64
    %v1503 = vpop.permute.xlu0 %1502
    %v1505 = vadd.f32 %v1441, %v1503
    %v1506 = vtanh.pop %v1505
    %v1507 = vsub.f32 1.0, %v1495
    %1509 = vrot.lane.b32.xlu0 %v1506, 96
    %v1510 = vpop.permute.xlu0 %1509
    %v1512 = vmul.f32 %v1507, %v1510
    %v1513 = vmul.f32 %v1495, %v1435
    %v1514 = vadd.f32 %v1512, %v1513
    %1516 = vrot.lane.b32.xlu0 %v1514, 96
    %v1517 = vpop.permute.xlu0 %1516
    %1519 = vst.msk [vmem:[%s735] sm:$0xff] %vm172, %v1517
    %v1520 = vld [vmem:[%s737] sm:$0xff]
    %v1521 = vpack.c.bf16 %v1514, %v1514
    %1523 = vrot.lane.b32.xlu0 %v1521, 96
    %v1524 = vpop.permute.xlu0 %1523
    %v1526 = vsel %vm172, %v1524, 0
    %1528 = vmatprep.subr.bf16.mxu0 0
    %1529 = vmatpush1.bf16.msra.mxu0 0
    %1530 = vmatprep.subr.bf16.mxu0 0
    %1531 = vmatpush1.bf16.msra.mxu0 0
    %1532 = vmatprep.subr.bf16.mxu0 0
    %1533 = vmatpush1.bf16.msra.mxu0 0
    %1534 = vmatprep.subr.bf16.mxu0 0
    %1535 = vmatpush1.bf16.msra.mxu0 0
    %1536 = vmatprep.subr.bf16.mxu0 0
    %1537 = vmatpush1.bf16.msra.mxu0 0
    %1538 = vmatprep.subr.bf16.mxu0 0
    %1539 = vmatpush1.bf16.msra.mxu0 0
    %1540 = vmatprep.subr.bf16.mxu0 0
    %1541 = vmatpush1.bf16.msra.mxu0 %v965
    %1542 = vmatprep.subr.bf16.mxu0 0
    %1543 = vmatpush1.bf16.msra.mxu0 %v964
    %1544 = vmatprep.subr.bf16.mxu0 0
    %1545 = vmatpush2.bf16.msra.mxu0 0
    %1546 = vmatprep.subr.bf16.mxu0 0
    %1547 = vmatpush2.bf16.msra.mxu0 0
    %1548 = vmatprep.subr.bf16.mxu0 0
    %1549 = vmatpush2.bf16.msra.mxu0 0
    %1550 = vmatprep.subr.bf16.mxu0 0
    %1551 = vmatpush2.bf16.msra.mxu0 0
    %1552 = vmatprep.subr.bf16.mxu0 0
    %1553 = vmatpush2.bf16.msra.mxu0 0
    %1554 = vmatprep.subr.bf16.mxu0 0
    %1555 = vmatpush2.bf16.msra.mxu0 0
    %1556 = vmatprep.subr.bf16.mxu0 0
    %1557 = vmatpush2.bf16.msra.mxu0 0
    %1558 = vmatprep.subr.bf16.mxu0 0
    %1559 = vmatpush2.bf16.msra.mxu0 0
    %1560 = vmatprep.mubr.bf16.mxu0 0
    %1561 = vmatmul.mubr.bf16.gmra.mxu0 %v1526
    %v1562 = vpop.f32.mrf.mxu0
    %v1563 = vadd.f32 %v950, %v1562
    %v1564 = vpop.f32.mrf.mxu0
    %v1565 = vpop.f32.mrf.mxu0
    %v1566 = vpop.f32.mrf.mxu0
    %1567 = vdwg.mxu0
    %v1568 = vadd.f32 %v1520, %v1563
    %v1569 = vxor.u32 %v1568, 2147483648
    %v1570 = vmul.f32 %v1569, 1.442695
    %v1571 = vpow.pop %v1570
    %v1572 = vadd.f32 %v1571, 1.0
    %v1573 = vrcp.pop %v1572
    %v1574 = vmul.f32 1.0, %v1573
    %1576 = vrot.lane.b32.xlu0 %v1563, 64
    %v1577 = vpop.permute.xlu0 %1576
    %v1579 = vmul.f32 %v1574, %v1577
    %1581 = vrot.lane.b32.xlu0 %v1579, 64
    %v1582 = vpop.permute.xlu0 %1581
    %v1584 = vadd.f32 %v1520, %v1582
    %v1585 = vtanh.pop %v1584
    %v1586 = vsub.f32 1.0, %v1574
    %1588 = vrot.lane.b32.xlu0 %v1585, 96
    %v1589 = vpop.permute.xlu0 %1588
    %v1591 = vmul.f32 %v1586, %v1589
    %v1592 = vmul.f32 %v1574, %v1514
    %v1593 = vadd.f32 %v1591, %v1592
    %1595 = vrot.lane.b32.xlu0 %v1593, 96
    %v1596 = vpop.permute.xlu0 %1595
    %1598 = vst.msk [vmem:[%s816] sm:$0xff] %vm172, %v1596
    %s1599 = scalar_lea.vmem [#allocation3], 8
    %1600 = vst.msk [vmem:[%s1599] sm:$0xff] %vm172, %v1596
    // Predicated region
    $region34: #{tpu_custom_call.1} parent=1 // pred_check
      _
    $region35: #{tpu_custom_call.1} parent=1 // pred_check_branch
      %1602 = sbr.rel (0) target = $region37
    $region36: #{tpu_custom_call.1} parent=1 // pred_region
      _
    $region37: #{tpu_custom_call.1} parent=1 // pred_fallthru
      _
    // Predicated region
    $region38: #{tpu_custom_call.1} parent=1 // pred_check
      _
    $region39: #{tpu_custom_call.1} parent=1 // pred_check_branch
      %1604 = sbr.rel (0) target = $region41
    $region40: #{tpu_custom_call.1} parent=1 // pred_region
      %s1606 = ssub.s32 256, 256
      %1607 = vsyncadd [#allocation4], %s1606
      %s1608 = sshll.u32 [#allocation3], 4
      %s1609 = int_to_ptr.vmem [resolvable:$true] %s1608
      %1614 = dma.vmem_to_hbm [thread:$0]  %s1609, 256, %s9, [#allocation4], 128, 128, 8
    $region41: #{tpu_custom_call.1} parent=1 // pred_fallthru
      _
    // Predicated region
    $region42: #{tpu_custom_call.1} parent=1 // pred_check
      _
    $region43: #{tpu_custom_call.1} parent=1 // pred_check_branch
      %1616 = sbr.rel (0) target = $region45
    $region44: #{tpu_custom_call.1} parent=1 // pred_region
      _
    $region45: #{tpu_custom_call.1} parent=1 // pred_fallthru
      _
    // Predicated region
    $region46: #{tpu_custom_call.1} parent=1 // pred_check
      _
    $region47: #{tpu_custom_call.1} parent=1 // pred_check_branch
      %1618 = sbr.rel (0) target = $region49
    $region48: #{tpu_custom_call.1} parent=1 // pred_region
      %1619 = dma.done [#allocation4], 256
    $region49: #{tpu_custom_call.1} parent=1 // pred_fallthru
      _
    %1620 = vsyncpa [#allocation4], 1

</llo_original>
